<compile_context>
chip_gen: v6e
topology: v6e:2x2x1
jax: 0.10.0
libtpu: 0.0.40
codegen_flags: <defaults>
</compile_context>

<pallas_src>
import jax
import jax.numpy as jnp
from jax import lax
from jax.experimental import pallas as pl
from jax.experimental.pallas import tpu as pltpu


def _num_tensorcores():
    """2 on v7x (two TensorCores per chip), 1 on v5e/v6e; safe fallback 1."""
    try:
        kind = jax.devices()[0].device_kind.lower()
        return 2 if "v7" in kind else 1
    except Exception:
        return 1


def _fused_linear_act_kernel(x_ref, w_ref, ba_ref, o_ref):
    # In-kernel f32 -> bf16 cast (VPU, hidden under the weight DMA).
    x = x_ref[...].astype(jnp.bfloat16)
    # Single MXU matmul (no K split), f32 accumulation, folded bias+add_value.
    y = jnp.dot(x, w_ref[...], preferred_element_type=jnp.float32) + ba_ref[...]
    # Swish: y * sigmoid(y), sigmoid via a single EUP tanh (exact identity).
    y = y * (0.5 * (1.0 + jnp.tanh(0.5 * y)))
    # Tanh
    y = jnp.tanh(y)
    # GELU (erf form): y * 0.5 * (1 + erf(y / sqrt(2)))
    y = y * 0.5 * (1.0 + lax.erf(y * 0.70710678))
    # Hardtanh clamp(-1, 1) omitted: input range is (-0.17, 0.85) -> no-op.
    o_ref[...] = y.astype(o_ref.dtype)


def fused_linear_activation(x, w_t, bias_add, *, tm=None, tn=None):
    """x: (B, K) f32, w_t: (K, N) bf16, bias_add: (1, N) f32 -> (B, N) f32."""
    B, K = x.shape
    K2, N = w_t.shape
    assert K == K2 and bias_add.shape == (1, N)

    # M tile: 256 fills the v6e/v7x MXU when batch allows; else full extent.
    if tm is None:
        tm = 256 if (B % 256 == 0) else B
    # N tile: split in two only on 2-TensorCore chips (v7x); otherwise keep
    # the whole problem in a single grid step (v5e/v6e have 1 TC).
    if tn is None:
        if _num_tensorcores() >= 2 and N % 256 == 0 and N >= 512:
            tn = N // 2
        else:
            tn = N
    grid = (B // tm, N // tn)

    return pl.pallas_call(
        _fused_linear_act_kernel,
        out_shape=jax.ShapeDtypeStruct((B, N), jnp.float32),
        grid_spec=pltpu.PrefetchScalarGridSpec(
            num_scalar_prefetch=0,
            grid=grid,
            in_specs=[
                pl.BlockSpec((tm, K), lambda i, j: (i, 0)),   # x (f32)
                pl.BlockSpec((K, tn), lambda i, j: (0, j)),   # w_t (bf16)
                pl.BlockSpec((1, tn), lambda i, j: (0, j)),   # bias+add (f32)
            ],
            out_specs=pl.BlockSpec((tm, tn), lambda i, j: (i, j)),
        ),
        compiler_params=pltpu.CompilerParams(
            dimension_semantics=("parallel", "parallel")),
    )(x, w_t, bias_add)


class ModelNew:
    """JAX/Pallas port of the PyTorch ModelNew (Linear + add_value + fused activation)."""

    def __init__(self, in_features, out_features, key,
                 compute_dtype=jnp.bfloat16):
        kw, kb, ka = jax.random.split(key, 3)
        bound = 1.0 / (in_features ** 0.5)
        # Parameters (match nn.Linear + nn.Parameter shapes of the PyTorch module).
        self.weight = jax.random.uniform(
            kw, (out_features, in_features), jnp.float32, -bound, bound)
        self.bias = jax.random.uniform(
            kb, (out_features,), jnp.float32, -bound, bound)
        self.add_value = jax.random.normal(ka, (out_features,), jnp.float32)

        # Cached, kernel-friendly constants (keep in sync if weights change):
        self.compute_dtype = compute_dtype
        self._w_t = jnp.asarray(self.weight.T, dtype=compute_dtype)          # (K, N)
        self._bias_add = (self.bias + self.add_value).reshape(1, -1).astype(jnp.float32)

    def __call__(self, x):
        # x stays f32; the bf16 cast happens inside the kernel.
        return fused_linear_activation(x, self._w_t, self._bias_add)


def _reference_f32(x, w, b, add_value):
    """Pure-f32 reference matching the PyTorch module exactly."""
    y = x @ w.T + b + add_value
    y = y * jax.nn.sigmoid(y)
    y = jnp.tanh(y)
    y = y * 0.5 * (1.0 + lax.erf(y * 0.70710678))
    return jnp.clip(y, -1.0, 1.0)


def _reference_bf16(x, w_t_bf16, bias_add):
    """Same quantization as the kernel (bf16 matmul inputs, f32 accumulation)."""
    y = jnp.dot(x.astype(jnp.bfloat16), w_t_bf16,
                preferred_element_type=jnp.float32) + bias_add
    y = y * jax.nn.sigmoid(y)
    y = jnp.tanh(y)
    y = y * 0.5 * (1.0 + lax.erf(y * 0.70710678))
    return jnp.clip(y, -1.0, 1.0)


if __name__ == "__main__":
    # Shapes from the spec: Linear(in_features=1024 -> out_features=512).
    # Batch 128 so the MXU sees a full tile on the M dimension.
    batch, in_features, out_features = 128, 1024, 512

    key = jax.random.PRNGKey(0)
    k_model, k_x = jax.random.split(key)
    model = ModelNew(in_features, out_features, k_model)

    x = jax.random.normal(k_x, (batch, in_features), jnp.float32)

    out = model(x)
    out = jax.block_until_ready(out)
    assert out.shape == (batch, out_features)
    assert out.dtype == jnp.float32

    # Tight check against a pure-JAX reference with the same bf16 quantization.
    ref_q = _reference_bf16(x, model._w_t, model._bias_add)
    assert jnp.allclose(out, ref_q, atol=5e-3, rtol=5e-3)

    # Looser check against the full-f32 PyTorch-equivalent reference
    # (bounds the bf16 quantization error of the fused kernel).
    ref = _reference_f32(x, model.weight, model.bias, model.add_value)
    assert jnp.allclose(out, ref, atol=2e-2, rtol=2e-2)

    print("KERNEL_OK")
</pallas_src>

<mosaic_0001>
module attributes {stable_mosaic.version = 11 : i64} {
  func.func @_fused_linear_act_kernel(%arg0: i32, %arg1: i32, %arg2: memref<128x1024xf32, #tpu.memory_space<vmem>>, %arg3: memref<1024x512xbf16, #tpu.memory_space<vmem>>, %arg4: memref<1x512xf32, #tpu.memory_space<vmem>>, %arg5: memref<128x512xf32, #tpu.memory_space<vmem>>) attributes {dimension_semantics = [#tpu.dimension_semantics<parallel>, #tpu.dimension_semantics<parallel>], iteration_bounds = array<i64: 1, 1>, scalar_prefetch = 0 : i64, scratch_operands = 0 : i64, tpu.core_type = #tpu.core_type<tc>, window_params = [{transform_indices = @transform_0, window_bounds = array<i64: 128, 1024>}, {transform_indices = @transform_1, window_bounds = array<i64: 1024, 512>}, {transform_indices = @transform_2, window_bounds = array<i64: 1, 512>}, {transform_indices = @transform_3, window_bounds = array<i64: 128, 512>}]} {
    %c0 = arith.constant 0 : index
    %c0_0 = arith.constant 0 : index
    %0 = vector.load %arg2[%c0, %c0_0] : memref<128x1024xf32, #tpu.memory_space<vmem>>, vector<128x1024xf32>
    %1 = arith.truncf %0 : vector<128x1024xf32> to vector<128x1024xbf16>
    %c0_1 = arith.constant 0 : index
    %c0_2 = arith.constant 0 : index
    %2 = vector.load %arg3[%c0_1, %c0_2] : memref<1024x512xbf16, #tpu.memory_space<vmem>>, vector<1024x512xbf16>
    %cst = arith.constant dense<0.000000e+00> : vector<128x512xf32>
    %3 = tpu.matmul %1, %2, %cst {dimension_numbers = #tpu.dot_dimension_numbers<[1], [0], [0], [1], [0, 0, 1, 1], [], []>} : vector<128x1024xbf16>, vector<1024x512xbf16>, vector<128x512xf32> -> vector<128x512xf32>
    %c0_3 = arith.constant 0 : index
    %c0_4 = arith.constant 0 : index
    %4 = vector.load %arg4[%c0_3, %c0_4] : memref<1x512xf32, #tpu.memory_space<vmem>>, vector<1x512xf32>
    %5 = vector.broadcast %4 : vector<1x512xf32> to vector<128x512xf32>
    %6 = arith.addf %3, %5 : vector<128x512xf32>
    %cst_5 = arith.constant 5.000000e-01 : f32
    %7 = vector.broadcast %cst_5 : f32 to vector<128x512xf32>
    %8 = arith.mulf %7, %6 : vector<128x512xf32>
    %9 = math.tanh %8 : vector<128x512xf32>
    %cst_6 = arith.constant 1.000000e+00 : f32
    %10 = vector.broadcast %cst_6 : f32 to vector<128x512xf32>
    %11 = arith.addf %10, %9 : vector<128x512xf32>
    %cst_7 = arith.constant 5.000000e-01 : f32
    %12 = vector.broadcast %cst_7 : f32 to vector<128x512xf32>
    %13 = arith.mulf %12, %11 : vector<128x512xf32>
    %14 = arith.mulf %6, %13 : vector<128x512xf32>
    %15 = math.tanh %14 : vector<128x512xf32>
    %cst_8 = arith.constant 5.000000e-01 : f32
    %16 = vector.broadcast %cst_8 : f32 to vector<128x512xf32>
    %17 = arith.mulf %15, %16 : vector<128x512xf32>
    %cst_9 = arith.constant 0.707106769 : f32
    %18 = vector.broadcast %cst_9 : f32 to vector<128x512xf32>
    %19 = arith.mulf %15, %18 : vector<128x512xf32>
    %20 = math.erf %19 : vector<128x512xf32>
    %cst_10 = arith.constant 1.000000e+00 : f32
    %21 = vector.broadcast %cst_10 : f32 to vector<128x512xf32>
    %22 = arith.addf %21, %20 : vector<128x512xf32>
    %23 = arith.mulf %17, %22 : vector<128x512xf32>
    %c0_11 = arith.constant 0 : index
    %c0_12 = arith.constant 0 : index
    %24 = vector.load %arg5[%c0_11, %c0_12] : memref<128x512xf32, #tpu.memory_space<vmem>>, vector<128x512xf32>
    tpu.vector_store %arg5[%c0_11, %c0_12], %23 {strides = array<i32>} : memref<128x512xf32, #tpu.memory_space<vmem>>, vector<128x512xf32>,
    return
  }
  func.func @transform_0(%arg0: i32, %arg1: i32) -> (i32, i32) {
    %c0_i32 = arith.constant 0 : i32
    %c0_i32_0 = arith.constant 0 : i32
    return %arg0, %c0_i32 : i32, i32
  }
  func.func @transform_1(%arg0: i32, %arg1: i32) -> (i32, i32) {
    %c0_i32 = arith.constant 0 : i32
    %c0_i32_0 = arith.constant 0 : i32
    return %c0_i32, %arg1 : i32, i32
  }
  func.func @transform_2(%arg0: i32, %arg1: i32) -> (i32, i32) {
    %c0_i32 = arith.constant 0 : i32
    %c0_i32_0 = arith.constant 0 : i32
    return %c0_i32, %arg1 : i32, i32
  }
  func.func @transform_3(%arg0: i32, %arg1: i32) -> (i32, i32) {
    %c0_i32 = arith.constant 0 : i32
    return %arg0, %arg1 : i32, i32
  }
}

</mosaic_0001>

<llo_original>
// kernel: tpu_custom_call.1
$region0: #{tpu_custom_call.1}
  #allocation0 [shape = 'u32[]', space=smem, size = 0x4, offset = 0x4, fixed_abs, tag = 'smem constant byte address 0x4 - core index']
  #allocation1 [shape = 'u32[144,128]{1,0:T(1,128)}', space=vmem, size = 0x12000, scoped, tag = 'internal scratch']
  %s0 = inlined_call_operand.hbm [shape: f32[128,1024], index: 0, kind: input, shape index: {}]
  %s1 = inlined_call_operand.hbm [shape: bf16[1024,512], index: 1, kind: input, shape index: {}]
  %s2 = inlined_call_operand.hbm [shape: f32[1,512], index: 2, kind: input, shape index: {}]
  %s3 = inlined_call_operand.hbm [shape: f32[128,512], index: 3, kind: output, shape index: {}]
  %s4 = sld [smem:[#allocation0]]
  $region34: #{tpu_custom_call.1} parent=0
    _
  %s6 = ssub.s32 1, %s4
  %s7 = scalar_select 0, %s6, %s4
  $region1: #{tpu_custom_call.1} parent=0
    #allocation2 [shape = 'u8[524288]{0}', space=vmem, size = 0x80000, scoped, tag = 'input window, operand 0, single buffered']
    #allocation3 [shape = 's32[1]{0}', space=sflag, size = 0x4, scoped, tag = 'scoped memory for tpu_custom_call.1']
    #allocation4 [shape = 's32[1]{0}', space=sflag, size = 0x4, scoped, tag = 'scoped memory for tpu_custom_call.1']
    #allocation5 [shape = 'u8[1048576]{0}', space=vmem, size = 0x100000, scoped, tag = 'input window, operand 1, single buffered']
    #allocation6 [shape = 's32[1]{0}', space=sflag, size = 0x4, scoped, tag = 'scoped memory for tpu_custom_call.1']
    #allocation7 [shape = 'u8[2048]{0}', space=vmem, size = 0x800, scoped, tag = 'input window, operand 2, single buffered']
    #allocation8 [shape = 'u8[262144]{0}', space=vmem, size = 0x40000, scoped, tag = 'output window, operand 0, single buffered']
    %8 = vsyncpa [#allocation3], 0
    %9 = vsyncpa [#allocation6], 0
    %10 = vsyncpa [#allocation4], 0
    // Predicated region
    $region2: #{tpu_custom_call.1} parent=1 // pred_check
      _
    $region3: #{tpu_custom_call.1} parent=1 // pred_check_branch
      %12 = sbr.rel (0) target = $region5
    $region4: #{tpu_custom_call.1} parent=1 // pred_region
      %s14 = ssub.s32 16384, 16384
      %15 = vsyncadd [#allocation3], %s14
      %s16 = sshll.u32 [#allocation2], 4
      %s17 = int_to_ptr.vmem [resolvable:$true] %s16
      %22 = dma.hbm_to_vmem [thread:$0]  %s0, 16384, %s17, [#allocation3], 1024, 1024, 64
    $region5: #{tpu_custom_call.1} parent=1 // pred_fallthru
      _
    // Predicated region
    $region6: #{tpu_custom_call.1} parent=1 // pred_check
      _
    $region7: #{tpu_custom_call.1} parent=1 // pred_check_branch
      %24 = sbr.rel (0) target = $region9
    $region8: #{tpu_custom_call.1} parent=1 // pred_region
      %s26 = ssub.s32 32768, 32768
      %27 = vsyncadd [#allocation6], %s26
      %s28 = sshll.u32 [#allocation5], 4
      %s29 = int_to_ptr.vmem [resolvable:$true] %s28
      %34 = dma.hbm_to_vmem [thread:$0]  %s1, 32768, %s29, [#allocation6], 256, 256, 16
    $region9: #{tpu_custom_call.1} parent=1 // pred_fallthru
      _
    // Predicated region
    $region10: #{tpu_custom_call.1} parent=1 // pred_check
      _
    $region11: #{tpu_custom_call.1} parent=1 // pred_check_branch
      %36 = sbr.rel (0) target = $region13
    $region12: #{tpu_custom_call.1} parent=1 // pred_region
      %s38 = ssub.s32 64, 64
      %39 = vsyncadd [#allocation6], %s38
      %s41 = sshll.u32 [#allocation7], 4
      %s42 = int_to_ptr.vmem [resolvable:$true] %s41
      %44 = dma.hbm_to_vmem [thread:$0]  %s2, 64, %s42, [#allocation6]
    $region13: #{tpu_custom_call.1} parent=1 // pred_fallthru
      _
    // Predicated region
    $region14: #{tpu_custom_call.1} parent=1 // pred_check
      _
    $region15: #{tpu_custom_call.1} parent=1 // pred_check_branch
      %46 = sbr.rel (0) target = $region17
    $region16: #{tpu_custom_call.1} parent=1 // pred_region
      %47 = dma.done [#allocation3], 16384
    $region17: #{tpu_custom_call.1} parent=1 // pred_fallthru
      _
    // Predicated region
    $region18: #{tpu_custom_call.1} parent=1 // pred_check
      _
    $region19: #{tpu_custom_call.1} parent=1 // pred_check_branch
      %49 = sbr.rel (0) target = $region21
    $region20: #{tpu_custom_call.1} parent=1 // pred_region
      %50 = dma.done [#allocation6], 32768
    $region21: #{tpu_custom_call.1} parent=1 // pred_fallthru
      _
    // Predicated region
    $region22: #{tpu_custom_call.1} parent=1 // pred_check
      _
    $region23: #{tpu_custom_call.1} parent=1 // pred_check_branch
      %52 = sbr.rel (0) target = $region25
    $region24: #{tpu_custom_call.1} parent=1 // pred_region
      %53 = dma.done [#allocation6], 64
    $region25: #{tpu_custom_call.1} parent=1 // pred_fallthru
      _
    %v54 = vld [vmem:[#allocation2] sm:$0xff]
    %v55 = vld [vmem:[#allocation2 + $0x8] sm:$0xff]
    %v56 = vld [vmem:[#allocation2 + $0x10] sm:$0xff]
    %v57 = vld [vmem:[#allocation2 + $0x18] sm:$0xff]
    %v58 = vld [vmem:[#allocation2 + $0x20] sm:$0xff]
    %v59 = vld [vmem:[#allocation2 + $0x28] sm:$0xff]
    %v60 = vld [vmem:[#allocation2 + $0x30] sm:$0xff]
    %v61 = vld [vmem:[#allocation2 + $0x38] sm:$0xff]
    %v62 = vld [vmem:[#allocation2 + $0x40] sm:$0xff]
    %v63 = vld [vmem:[#allocation2 + $0x48] sm:$0xff]
    %v64 = vld [vmem:[#allocation2 + $0x50] sm:$0xff]
    %v65 = vld [vmem:[#allocation2 + $0x58] sm:$0xff]
    %v66 = vld [vmem:[#allocation2 + $0x60] sm:$0xff]
    %v67 = vld [vmem:[#allocation2 + $0x68] sm:$0xff]
    %v68 = vld [vmem:[#allocation2 + $0x70] sm:$0xff]
    %v69 = vld [vmem:[#allocation2 + $0x78] sm:$0xff]
    %v70 = vld [vmem:[#allocation2 + $0x80] sm:$0xff]
    %v71 = vld [vmem:[#allocation2 + $0x88] sm:$0xff]
    %v72 = vld [vmem:[#allocation2 + $0x90] sm:$0xff]
    %v73 = vld [vmem:[#allocation2 + $0x98] sm:$0xff]
    %v74 = vld [vmem:[#allocation2 + $0xa0] sm:$0xff]
    %v75 = vld [vmem:[#allocation2 + $0xa8] sm:$0xff]
    %v76 = vld [vmem:[#allocation2 + $0xb0] sm:$0xff]
    %v77 = vld [vmem:[#allocation2 + $0xb8] sm:$0xff]
    %v78 = vld [vmem:[#allocation2 + $0xc0] sm:$0xff]
    %v79 = vld [vmem:[#allocation2 + $0xc8] sm:$0xff]
    %v80 = vld [vmem:[#allocation2 + $0xd0] sm:$0xff]
    %v81 = vld [vmem:[#allocation2 + $0xd8] sm:$0xff]
    %v82 = vld [vmem:[#allocation2 + $0xe0] sm:$0xff]
    %v83 = vld [vmem:[#allocation2 + $0xe8] sm:$0xff]
    %v84 = vld [vmem:[#allocation2 + $0xf0] sm:$0xff]
    %v85 = vld [vmem:[#allocation2 + $0xf8] sm:$0xff]
    %v86 = vld [vmem:[#allocation2 + $0x100] sm:$0xff]
    %v87 = vld [vmem:[#allocation2 + $0x108] sm:$0xff]
    %v88 = vld [vmem:[#allocation2 + $0x110] sm:$0xff]
    %v89 = vld [vmem:[#allocation2 + $0x118] sm:$0xff]
    %v90 = vld [vmem:[#allocation2 + $0x120] sm:$0xff]
    %v91 = vld [vmem:[#allocation2 + $0x128] sm:$0xff]
    %v92 = vld [vmem:[#allocation2 + $0x130] sm:$0xff]
    %v93 = vld [vmem:[#allocation2 + $0x138] sm:$0xff]
    %v94 = vld [vmem:[#allocation2 + $0x140] sm:$0xff]
    %v95 = vld [vmem:[#allocation2 + $0x148] sm:$0xff]
    %v96 = vld [vmem:[#allocation2 + $0x150] sm:$0xff]
    %v97 = vld [vmem:[#allocation2 + $0x158] sm:$0xff]
    %v98 = vld [vmem:[#allocation2 + $0x160] sm:$0xff]
    %v99 = vld [vmem:[#allocation2 + $0x168] sm:$0xff]
    %v100 = vld [vmem:[#allocation2 + $0x170] sm:$0xff]
    %v101 = vld [vmem:[#allocation2 + $0x178] sm:$0xff]
    %v102 = vld [vmem:[#allocation2 + $0x180] sm:$0xff]
    %v103 = vld [vmem:[#allocation2 + $0x188] sm:$0xff]
    %v104 = vld [vmem:[#allocation2 + $0x190] sm:$0xff]
    %v105 = vld [vmem:[#allocation2 + $0x198] sm:$0xff]
    %v106 = vld [vmem:[#allocation2 + $0x1a0] sm:$0xff]
    %v107 = vld [vmem:[#allocation2 + $0x1a8] sm:$0xff]
    %v108 = vld [vmem:[#allocation2 + $0x1b0] sm:$0xff]
    %v109 = vld [vmem:[#allocation2 + $0x1b8] sm:$0xff]
    %v110 = vld [vmem:[#allocation2 + $0x1c0] sm:$0xff]
    %v111 = vld [vmem:[#allocation2 + $0x1c8] sm:$0xff]
    %v112 = vld [vmem:[#allocation2 + $0x1d0] sm:$0xff]
    %v113 = vld [vmem:[#allocation2 + $0x1d8] sm:$0xff]
    %v114 = vld [vmem:[#allocation2 + $0x1e0] sm:$0xff]
    %v115 = vld [vmem:[#allocation2 + $0x1e8] sm:$0xff]
    %v116 = vld [vmem:[#allocation2 + $0x1f0] sm:$0xff]
    %v117 = vld [vmem:[#allocation2 + $0x1f8] sm:$0xff]
    %v118 = vld [vmem:[#allocation2 + $0x200] sm:$0xff]
    %v119 = vld [vmem:[#allocation2 + $0x208] sm:$0xff]
    %v120 = vld [vmem:[#allocation2 + $0x210] sm:$0xff]
    %v121 = vld [vmem:[#allocation2 + $0x218] sm:$0xff]
    %v122 = vld [vmem:[#allocation2 + $0x220] sm:$0xff]
    %v123 = vld [vmem:[#allocation2 + $0x228] sm:$0xff]
    %v124 = vld [vmem:[#allocation2 + $0x230] sm:$0xff]
    %v125 = vld [vmem:[#allocation2 + $0x238] sm:$0xff]
    %v126 = vld [vmem:[#allocation2 + $0x240] sm:$0xff]
    %v127 = vld [vmem:[#allocation2 + $0x248] sm:$0xff]
    %v128 = vld [vmem:[#allocation2 + $0x250] sm:$0xff]
    %v129 = vld [vmem:[#allocation2 + $0x258] sm:$0xff]
    %v130 = vld [vmem:[#allocation2 + $0x260] sm:$0xff]
    %v131 = vld [vmem:[#allocation2 + $0x268] sm:$0xff]
    %v132 = vld [vmem:[#allocation2 + $0x270] sm:$0xff]
    %v133 = vld [vmem:[#allocation2 + $0x278] sm:$0xff]
    %v134 = vld [vmem:[#allocation2 + $0x280] sm:$0xff]
    %v135 = vld [vmem:[#allocation2 + $0x288] sm:$0xff]
    %v136 = vld [vmem:[#allocation2 + $0x290] sm:$0xff]
    %v137 = vld [vmem:[#allocation2 + $0x298] sm:$0xff]
    %v138 = vld [vmem:[#allocation2 + $0x2a0] sm:$0xff]
    %v139 = vld [vmem:[#allocation2 + $0x2a8] sm:$0xff]
    %v140 = vld [vmem:[#allocation2 + $0x2b0] sm:$0xff]
    %v141 = vld [vmem:[#allocation2 + $0x2b8] sm:$0xff]
    %v142 = vld [vmem:[#allocation2 + $0x2c0] sm:$0xff]
    %v143 = vld [vmem:[#allocation2 + $0x2c8] sm:$0xff]
    %v144 = vld [vmem:[#allocation2 + $0x2d0] sm:$0xff]
    %v145 = vld [vmem:[#allocation2 + $0x2d8] sm:$0xff]
    %v146 = vld [vmem:[#allocation2 + $0x2e0] sm:$0xff]
    %v147 = vld [vmem:[#allocation2 + $0x2e8] sm:$0xff]
    %v148 = vld [vmem:[#allocation2 + $0x2f0] sm:$0xff]
    %v149 = vld [vmem:[#allocation2 + $0x2f8] sm:$0xff]
    %v150 = vld [vmem:[#allocation2 + $0x300] sm:$0xff]
    %v151 = vld [vmem:[#allocation2 + $0x308] sm:$0xff]
    %v152 = vld [vmem:[#allocation2 + $0x310] sm:$0xff]
    %v153 = vld [vmem:[#allocation2 + $0x318] sm:$0xff]
    %v154 = vld [vmem:[#allocation2 + $0x320] sm:$0xff]
    %v155 = vld [vmem:[#allocation2 + $0x328] sm:$0xff]
    %v156 = vld [vmem:[#allocation2 + $0x330] sm:$0xff]
    %v157 = vld [vmem:[#allocation2 + $0x338] sm:$0xff]
    %v158 = vld [vmem:[#allocation2 + $0x340] sm:$0xff]
    %v159 = vld [vmem:[#allocation2 + $0x348] sm:$0xff]
    %v160 = vld [vmem:[#allocation2 + $0x350] sm:$0xff]
    %v161 = vld [vmem:[#allocation2 + $0x358] sm:$0xff]
    %v162 = vld [vmem:[#allocation2 + $0x360] sm:$0xff]
    %v163 = vld [vmem:[#allocation2 + $0x368] sm:$0xff]
    %v164 = vld [vmem:[#allocation2 + $0x370] sm:$0xff]
    %v165 = vld [vmem:[#allocation2 + $0x378] sm:$0xff]
    %v166 = vld [vmem:[#allocation2 + $0x380] sm:$0xff]
    %v167 = vld [vmem:[#allocation2 + $0x388] sm:$0xff]
    %v168 = vld [vmem:[#allocation2 + $0x390] sm:$0xff]
    %v169 = vld [vmem:[#allocation2 + $0x398] sm:$0xff]
    %v170 = vld [vmem:[#allocation2 + $0x3a0] sm:$0xff]
    %v171 = vld [vmem:[#allocation2 + $0x3a8] sm:$0xff]
    %v172 = vld [vmem:[#allocation2 + $0x3b0] sm:$0xff]
    %v173 = vld [vmem:[#allocation2 + $0x3b8] sm:$0xff]
    %v174 = vld [vmem:[#allocation2 + $0x3c0] sm:$0xff]
    %v175 = vld [vmem:[#allocation2 + $0x3c8] sm:$0xff]
    %v176 = vld [vmem:[#allocation2 + $0x3d0] sm:$0xff]
    %v177 = vld [vmem:[#allocation2 + $0x3d8] sm:$0xff]
    %v178 = vld [vmem:[#allocation2 + $0x3e0] sm:$0xff]
    %v179 = vld [vmem:[#allocation2 + $0x3e8] sm:$0xff]
    %v180 = vld [vmem:[#allocation2 + $0x3f0] sm:$0xff]
    %v181 = vld [vmem:[#allocation2 + $0x3f8] sm:$0xff]
    %v182 = vpack.c.bf16 %v62, %v54
    %v183 = vpack.c.bf16 %v63, %v55
    %v184 = vpack.c.bf16 %v64, %v56
    %v185 = vpack.c.bf16 %v65, %v57
    %v186 = vpack.c.bf16 %v66, %v58
    %v187 = vpack.c.bf16 %v67, %v59
    %v188 = vpack.c.bf16 %v68, %v60
    %v189 = vpack.c.bf16 %v69, %v61
    %v190 = vpack.c.bf16 %v78, %v70
    %v191 = vpack.c.bf16 %v79, %v71
    %v192 = vpack.c.bf16 %v80, %v72
    %v193 = vpack.c.bf16 %v81, %v73
    %v194 = vpack.c.bf16 %v82, %v74
    %v195 = vpack.c.bf16 %v83, %v75
    %v196 = vpack.c.bf16 %v84, %v76
    %v197 = vpack.c.bf16 %v85, %v77
    %v198 = vpack.c.bf16 %v94, %v86
    %v199 = vpack.c.bf16 %v95, %v87
    %v200 = vpack.c.bf16 %v96, %v88
    %v201 = vpack.c.bf16 %v97, %v89
    %v202 = vpack.c.bf16 %v98, %v90
    %v203 = vpack.c.bf16 %v99, %v91
    %v204 = vpack.c.bf16 %v100, %v92
    %v205 = vpack.c.bf16 %v101, %v93
    %v206 = vpack.c.bf16 %v110, %v102
    %v207 = vpack.c.bf16 %v111, %v103
    %v208 = vpack.c.bf16 %v112, %v104
    %v209 = vpack.c.bf16 %v113, %v105
    %v210 = vpack.c.bf16 %v114, %v106
    %v211 = vpack.c.bf16 %v115, %v107
    %v212 = vpack.c.bf16 %v116, %v108
    %v213 = vpack.c.bf16 %v117, %v109
    %v214 = vpack.c.bf16 %v126, %v118
    %v215 = vpack.c.bf16 %v127, %v119
    %v216 = vpack.c.bf16 %v128, %v120
    %v217 = vpack.c.bf16 %v129, %v121
    %v218 = vpack.c.bf16 %v130, %v122
    %v219 = vpack.c.bf16 %v131, %v123
    %v220 = vpack.c.bf16 %v132, %v124
    %v221 = vpack.c.bf16 %v133, %v125
    %v222 = vpack.c.bf16 %v142, %v134
    %v223 = vpack.c.bf16 %v143, %v135
    %v224 = vpack.c.bf16 %v144, %v136
    %v225 = vpack.c.bf16 %v145, %v137
    %v226 = vpack.c.bf16 %v146, %v138
    %v227 = vpack.c.bf16 %v147, %v139
    %v228 = vpack.c.bf16 %v148, %v140
    %v229 = vpack.c.bf16 %v149, %v141
    %v230 = vpack.c.bf16 %v158, %v150
    %v231 = vpack.c.bf16 %v159, %v151
    %v232 = vpack.c.bf16 %v160, %v152
    %v233 = vpack.c.bf16 %v161, %v153
    %v234 = vpack.c.bf16 %v162, %v154
    %v235 = vpack.c.bf16 %v163, %v155
    %v236 = vpack.c.bf16 %v164, %v156
    %v237 = vpack.c.bf16 %v165, %v157
    %v238 = vpack.c.bf16 %v174, %v166
    %v239 = vpack.c.bf16 %v175, %v167
    %v240 = vpack.c.bf16 %v176, %v168
    %v241 = vpack.c.bf16 %v177, %v169
    %v242 = vpack.c.bf16 %v178, %v170
    %v243 = vpack.c.bf16 %v179, %v171
    %v244 = vpack.c.bf16 %v180, %v172
    %v245 = vpack.c.bf16 %v181, %v173
    %v246 = vld [vmem:[#allocation5] sm:$0xff]
    %v247 = vld [vmem:[#allocation5 + $0x8] sm:$0xff]
    %v248 = vld [vmem:[#allocation5 + $0x10] sm:$0xff]
    %v249 = vld [vmem:[#allocation5 + $0x18] sm:$0xff]
    %v250 = vld [vmem:[#allocation5 + $0x20] sm:$0xff]
    %v251 = vld [vmem:[#allocation5 + $0x28] sm:$0xff]
    %v252 = vld [vmem:[#allocation5 + $0x30] sm:$0xff]
    %v253 = vld [vmem:[#allocation5 + $0x38] sm:$0xff]
    %v254 = vld [vmem:[#allocation5 + $0x40] sm:$0xff]
    %v255 = vld [vmem:[#allocation5 + $0x48] sm:$0xff]
    %v256 = vld [vmem:[#allocation5 + $0x50] sm:$0xff]
    %v257 = vld [vmem:[#allocation5 + $0x58] sm:$0xff]
    %v258 = vld [vmem:[#allocation5 + $0x60] sm:$0xff]
    %v259 = vld [vmem:[#allocation5 + $0x68] sm:$0xff]
    %v260 = vld [vmem:[#allocation5 + $0x70] sm:$0xff]
    %v261 = vld [vmem:[#allocation5 + $0x78] sm:$0xff]
    %v262 = vld [vmem:[#allocation5 + $0x80] sm:$0xff]
    %v263 = vld [vmem:[#allocation5 + $0x88] sm:$0xff]
    %v264 = vld [vmem:[#allocation5 + $0x90] sm:$0xff]
    %v265 = vld [vmem:[#allocation5 + $0x98] sm:$0xff]
    %v266 = vld [vmem:[#allocation5 + $0xa0] sm:$0xff]
    %v267 = vld [vmem:[#allocation5 + $0xa8] sm:$0xff]
    %v268 = vld [vmem:[#allocation5 + $0xb0] sm:$0xff]
    %v269 = vld [vmem:[#allocation5 + $0xb8] sm:$0xff]
    %v270 = vld [vmem:[#allocation5 + $0xc0] sm:$0xff]
    %v271 = vld [vmem:[#allocation5 + $0xc8] sm:$0xff]
    %v272 = vld [vmem:[#allocation5 + $0xd0] sm:$0xff]
    %v273 = vld [vmem:[#allocation5 + $0xd8] sm:$0xff]
    %v274 = vld [vmem:[#allocation5 + $0xe0] sm:$0xff]
    %v275 = vld [vmem:[#allocation5 + $0xe8] sm:$0xff]
    %v276 = vld [vmem:[#allocation5 + $0xf0] sm:$0xff]
    %v277 = vld [vmem:[#allocation5 + $0xf8] sm:$0xff]
    %v278 = vld [vmem:[#allocation5 + $0x100] sm:$0xff]
    %v279 = vld [vmem:[#allocation5 + $0x108] sm:$0xff]
    %v280 = vld [vmem:[#allocation5 + $0x110] sm:$0xff]
    %v281 = vld [vmem:[#allocation5 + $0x118] sm:$0xff]
    %v282 = vld [vmem:[#allocation5 + $0x120] sm:$0xff]
    %v283 = vld [vmem:[#allocation5 + $0x128] sm:$0xff]
    %v284 = vld [vmem:[#allocation5 + $0x130] sm:$0xff]
    %v285 = vld [vmem:[#allocation5 + $0x138] sm:$0xff]
    %v286 = vld [vmem:[#allocation5 + $0x140] sm:$0xff]
    %v287 = vld [vmem:[#allocation5 + $0x148] sm:$0xff]
    %v288 = vld [vmem:[#allocation5 + $0x150] sm:$0xff]
    %v289 = vld [vmem:[#allocation5 + $0x158] sm:$0xff]
    %v290 = vld [vmem:[#allocation5 + $0x160] sm:$0xff]
    %v291 = vld [vmem:[#allocation5 + $0x168] sm:$0xff]
    %v292 = vld [vmem:[#allocation5 + $0x170] sm:$0xff]
    %v293 = vld [vmem:[#allocation5 + $0x178] sm:$0xff]
    %v294 = vld [vmem:[#allocation5 + $0x180] sm:$0xff]
    %v295 = vld [vmem:[#allocation5 + $0x188] sm:$0xff]
    %v296 = vld [vmem:[#allocation5 + $0x190] sm:$0xff]
    %v297 = vld [vmem:[#allocation5 + $0x198] sm:$0xff]
    %v298 = vld [vmem:[#allocation5 + $0x1a0] sm:$0xff]
    %v299 = vld [vmem:[#allocation5 + $0x1a8] sm:$0xff]
    %v300 = vld [vmem:[#allocation5 + $0x1b0] sm:$0xff]
    %v301 = vld [vmem:[#allocation5 + $0x1b8] sm:$0xff]
    %v302 = vld [vmem:[#allocation5 + $0x1c0] sm:$0xff]
    %v303 = vld [vmem:[#allocation5 + $0x1c8] sm:$0xff]
    %v304 = vld [vmem:[#allocation5 + $0x1d0] sm:$0xff]
    %v305 = vld [vmem:[#allocation5 + $0x1d8] sm:$0xff]
    %v306 = vld [vmem:[#allocation5 + $0x1e0] sm:$0xff]
    %v307 = vld [vmem:[#allocation5 + $0x1e8] sm:$0xff]
    %v308 = vld [vmem:[#allocation5 + $0x1f0] sm:$0xff]
    %v309 = vld [vmem:[#allocation5 + $0x1f8] sm:$0xff]
    %v310 = vld [vmem:[#allocation5 + $0x200] sm:$0xff]
    %v311 = vld [vmem:[#allocation5 + $0x208] sm:$0xff]
    %v312 = vld [vmem:[#allocation5 + $0x210] sm:$0xff]
    %v313 = vld [vmem:[#allocation5 + $0x218] sm:$0xff]
    %v314 = vld [vmem:[#allocation5 + $0x220] sm:$0xff]
    %v315 = vld [vmem:[#allocation5 + $0x228] sm:$0xff]
    %v316 = vld [vmem:[#allocation5 + $0x230] sm:$0xff]
    %v317 = vld [vmem:[#allocation5 + $0x238] sm:$0xff]
    %v318 = vld [vmem:[#allocation5 + $0x240] sm:$0xff]
    %v319 = vld [vmem:[#allocation5 + $0x248] sm:$0xff]
    %v320 = vld [vmem:[#allocation5 + $0x250] sm:$0xff]
    %v321 = vld [vmem:[#allocation5 + $0x258] sm:$0xff]
    %v322 = vld [vmem:[#allocation5 + $0x260] sm:$0xff]
    %v323 = vld [vmem:[#allocation5 + $0x268] sm:$0xff]
    %v324 = vld [vmem:[#allocation5 + $0x270] sm:$0xff]
    %v325 = vld [vmem:[#allocation5 + $0x278] sm:$0xff]
    %v326 = vld [vmem:[#allocation5 + $0x280] sm:$0xff]
    %v327 = vld [vmem:[#allocation5 + $0x288] sm:$0xff]
    %v328 = vld [vmem:[#allocation5 + $0x290] sm:$0xff]
    %v329 = vld [vmem:[#allocation5 + $0x298] sm:$0xff]
    %v330 = vld [vmem:[#allocation5 + $0x2a0] sm:$0xff]
    %v331 = vld [vmem:[#allocation5 + $0x2a8] sm:$0xff]
    %v332 = vld [vmem:[#allocation5 + $0x2b0] sm:$0xff]
    %v333 = vld [vmem:[#allocation5 + $0x2b8] sm:$0xff]
    %v334 = vld [vmem:[#allocation5 + $0x2c0] sm:$0xff]
    %v335 = vld [vmem:[#allocation5 + $0x2c8] sm:$0xff]
    %v336 = vld [vmem:[#allocation5 + $0x2d0] sm:$0xff]
    %v337 = vld [vmem:[#allocation5 + $0x2d8] sm:$0xff]
    %v338 = vld [vmem:[#allocation5 + $0x2e0] sm:$0xff]
    %v339 = vld [vmem:[#allocation5 + $0x2e8] sm:$0xff]
    %v340 = vld [vmem:[#allocation5 + $0x2f0] sm:$0xff]
    %v341 = vld [vmem:[#allocation5 + $0x2f8] sm:$0xff]
    %v342 = vld [vmem:[#allocation5 + $0x300] sm:$0xff]
    %v343 = vld [vmem:[#allocation5 + $0x308] sm:$0xff]
    %v344 = vld [vmem:[#allocation5 + $0x310] sm:$0xff]
    %v345 = vld [vmem:[#allocation5 + $0x318] sm:$0xff]
    %v346 = vld [vmem:[#allocation5 + $0x320] sm:$0xff]
    %v347 = vld [vmem:[#allocation5 + $0x328] sm:$0xff]
    %v348 = vld [vmem:[#allocation5 + $0x330] sm:$0xff]
    %v349 = vld [vmem:[#allocation5 + $0x338] sm:$0xff]
    %v350 = vld [vmem:[#allocation5 + $0x340] sm:$0xff]
    %v351 = vld [vmem:[#allocation5 + $0x348] sm:$0xff]
    %v352 = vld [vmem:[#allocation5 + $0x350] sm:$0xff]
    %v353 = vld [vmem:[#allocation5 + $0x358] sm:$0xff]
    %v354 = vld [vmem:[#allocation5 + $0x360] sm:$0xff]
    %v355 = vld [vmem:[#allocation5 + $0x368] sm:$0xff]
    %v356 = vld [vmem:[#allocation5 + $0x370] sm:$0xff]
    %v357 = vld [vmem:[#allocation5 + $0x378] sm:$0xff]
    %v358 = vld [vmem:[#allocation5 + $0x380] sm:$0xff]
    %v359 = vld [vmem:[#allocation5 + $0x388] sm:$0xff]
    %v360 = vld [vmem:[#allocation5 + $0x390] sm:$0xff]
    %v361 = vld [vmem:[#allocation5 + $0x398] sm:$0xff]
    %v362 = vld [vmem:[#allocation5 + $0x3a0] sm:$0xff]
    %v363 = vld [vmem:[#allocation5 + $0x3a8] sm:$0xff]
    %v364 = vld [vmem:[#allocation5 + $0x3b0] sm:$0xff]
    %v365 = vld [vmem:[#allocation5 + $0x3b8] sm:$0xff]
    %v366 = vld [vmem:[#allocation5 + $0x3c0] sm:$0xff]
    %v367 = vld [vmem:[#allocation5 + $0x3c8] sm:$0xff]
    %v368 = vld [vmem:[#allocation5 + $0x3d0] sm:$0xff]
    %v369 = vld [vmem:[#allocation5 + $0x3d8] sm:$0xff]
    %v370 = vld [vmem:[#allocation5 + $0x3e0] sm:$0xff]
    %v371 = vld [vmem:[#allocation5 + $0x3e8] sm:$0xff]
    %v372 = vld [vmem:[#allocation5 + $0x3f0] sm:$0xff]
    %v373 = vld [vmem:[#allocation5 + $0x3f8] sm:$0xff]
    %v374 = vld [vmem:[#allocation5 + $0x400] sm:$0xff]
    %v375 = vld [vmem:[#allocation5 + $0x408] sm:$0xff]
    %v376 = vld [vmem:[#allocation5 + $0x410] sm:$0xff]
    %v377 = vld [vmem:[#allocation5 + $0x418] sm:$0xff]
    %v378 = vld [vmem:[#allocation5 + $0x420] sm:$0xff]
    %v379 = vld [vmem:[#allocation5 + $0x428] sm:$0xff]
    %v380 = vld [vmem:[#allocation5 + $0x430] sm:$0xff]
    %v381 = vld [vmem:[#allocation5 + $0x438] sm:$0xff]
    %v382 = vld [vmem:[#allocation5 + $0x440] sm:$0xff]
    %v383 = vld [vmem:[#allocation5 + $0x448] sm:$0xff]
    %v384 = vld [vmem:[#allocation5 + $0x450] sm:$0xff]
    %v385 = vld [vmem:[#allocation5 + $0x458] sm:$0xff]
    %v386 = vld [vmem:[#allocation5 + $0x460] sm:$0xff]
    %v387 = vld [vmem:[#allocation5 + $0x468] sm:$0xff]
    %v388 = vld [vmem:[#allocation5 + $0x470] sm:$0xff]
    %v389 = vld [vmem:[#allocation5 + $0x478] sm:$0xff]
    %v390 = vld [vmem:[#allocation5 + $0x480] sm:$0xff]
    %v391 = vld [vmem:[#allocation5 + $0x488] sm:$0xff]
    %v392 = vld [vmem:[#allocation5 + $0x490] sm:$0xff]
    %v393 = vld [vmem:[#allocation5 + $0x498] sm:$0xff]
    %v394 = vld [vmem:[#allocation5 + $0x4a0] sm:$0xff]
    %v395 = vld [vmem:[#allocation5 + $0x4a8] sm:$0xff]
    %v396 = vld [vmem:[#allocation5 + $0x4b0] sm:$0xff]
    %v397 = vld [vmem:[#allocation5 + $0x4b8] sm:$0xff]
    %v398 = vld [vmem:[#allocation5 + $0x4c0] sm:$0xff]
    %v399 = vld [vmem:[#allocation5 + $0x4c8] sm:$0xff]
    %v400 = vld [vmem:[#allocation5 + $0x4d0] sm:$0xff]
    %v401 = vld [vmem:[#allocation5 + $0x4d8] sm:$0xff]
    %v402 = vld [vmem:[#allocation5 + $0x4e0] sm:$0xff]
    %v403 = vld [vmem:[#allocation5 + $0x4e8] sm:$0xff]
    %v404 = vld [vmem:[#allocation5 + $0x4f0] sm:$0xff]
    %v405 = vld [vmem:[#allocation5 + $0x4f8] sm:$0xff]
    %v406 = vld [vmem:[#allocation5 + $0x500] sm:$0xff]
    %v407 = vld [vmem:[#allocation5 + $0x508] sm:$0xff]
    %v408 = vld [vmem:[#allocation5 + $0x510] sm:$0xff]
    %v409 = vld [vmem:[#allocation5 + $0x518] sm:$0xff]
    %v410 = vld [vmem:[#allocation5 + $0x520] sm:$0xff]
    %v411 = vld [vmem:[#allocation5 + $0x528] sm:$0xff]
    %v412 = vld [vmem:[#allocation5 + $0x530] sm:$0xff]
    %v413 = vld [vmem:[#allocation5 + $0x538] sm:$0xff]
    %v414 = vld [vmem:[#allocation5 + $0x540] sm:$0xff]
    %v415 = vld [vmem:[#allocation5 + $0x548] sm:$0xff]
    %v416 = vld [vmem:[#allocation5 + $0x550] sm:$0xff]
    %v417 = vld [vmem:[#allocation5 + $0x558] sm:$0xff]
    %v418 = vld [vmem:[#allocation5 + $0x560] sm:$0xff]
    %v419 = vld [vmem:[#allocation5 + $0x568] sm:$0xff]
    %v420 = vld [vmem:[#allocation5 + $0x570] sm:$0xff]
    %v421 = vld [vmem:[#allocation5 + $0x578] sm:$0xff]
    %v422 = vld [vmem:[#allocation5 + $0x580] sm:$0xff]
    %v423 = vld [vmem:[#allocation5 + $0x588] sm:$0xff]
    %v424 = vld [vmem:[#allocation5 + $0x590] sm:$0xff]
    %v425 = vld [vmem:[#allocation5 + $0x598] sm:$0xff]
    %v426 = vld [vmem:[#allocation5 + $0x5a0] sm:$0xff]
    %v427 = vld [vmem:[#allocation5 + $0x5a8] sm:$0xff]
    %v428 = vld [vmem:[#allocation5 + $0x5b0] sm:$0xff]
    %v429 = vld [vmem:[#allocation5 + $0x5b8] sm:$0xff]
    %v430 = vld [vmem:[#allocation5 + $0x5c0] sm:$0xff]
    %v431 = vld [vmem:[#allocation5 + $0x5c8] sm:$0xff]
    %v432 = vld [vmem:[#allocation5 + $0x5d0] sm:$0xff]
    %v433 = vld [vmem:[#allocation5 + $0x5d8] sm:$0xff]
    %v434 = vld [vmem:[#allocation5 + $0x5e0] sm:$0xff]
    %v435 = vld [vmem:[#allocation5 + $0x5e8] sm:$0xff]
    %v436 = vld [vmem:[#allocation5 + $0x5f0] sm:$0xff]
    %v437 = vld [vmem:[#allocation5 + $0x5f8] sm:$0xff]
    %v438 = vld [vmem:[#allocation5 + $0x600] sm:$0xff]
    %v439 = vld [vmem:[#allocation5 + $0x608] sm:$0xff]
    %v440 = vld [vmem:[#allocation5 + $0x610] sm:$0xff]
    %v441 = vld [vmem:[#allocation5 + $0x618] sm:$0xff]
    %v442 = vld [vmem:[#allocation5 + $0x620] sm:$0xff]
    %v443 = vld [vmem:[#allocation5 + $0x628] sm:$0xff]
    %v444 = vld [vmem:[#allocation5 + $0x630] sm:$0xff]
    %v445 = vld [vmem:[#allocation5 + $0x638] sm:$0xff]
    %v446 = vld [vmem:[#allocation5 + $0x640] sm:$0xff]
    %v447 = vld [vmem:[#allocation5 + $0x648] sm:$0xff]
    %v448 = vld [vmem:[#allocation5 + $0x650] sm:$0xff]
    %v449 = vld [vmem:[#allocation5 + $0x658] sm:$0xff]
    %v450 = vld [vmem:[#allocation5 + $0x660] sm:$0xff]
    %v451 = vld [vmem:[#allocation5 + $0x668] sm:$0xff]
    %v452 = vld [vmem:[#allocation5 + $0x670] sm:$0xff]
    %v453 = vld [vmem:[#allocation5 + $0x678] sm:$0xff]
    %v454 = vld [vmem:[#allocation5 + $0x680] sm:$0xff]
    %v455 = vld [vmem:[#allocation5 + $0x688] sm:$0xff]
    %v456 = vld [vmem:[#allocation5 + $0x690] sm:$0xff]
    %v457 = vld [vmem:[#allocation5 + $0x698] sm:$0xff]
    %v458 = vld [vmem:[#allocation5 + $0x6a0] sm:$0xff]
    %v459 = vld [vmem:[#allocation5 + $0x6a8] sm:$0xff]
    %v460 = vld [vmem:[#allocation5 + $0x6b0] sm:$0xff]
    %v461 = vld [vmem:[#allocation5 + $0x6b8] sm:$0xff]
    %v462 = vld [vmem:[#allocation5 + $0x6c0] sm:$0xff]
    %v463 = vld [vmem:[#allocation5 + $0x6c8] sm:$0xff]
    %v464 = vld [vmem:[#allocation5 + $0x6d0] sm:$0xff]
    %v465 = vld [vmem:[#allocation5 + $0x6d8] sm:$0xff]
    %v466 = vld [vmem:[#allocation5 + $0x6e0] sm:$0xff]
    %v467 = vld [vmem:[#allocation5 + $0x6e8] sm:$0xff]
    %v468 = vld [vmem:[#allocation5 + $0x6f0] sm:$0xff]
    %v469 = vld [vmem:[#allocation5 + $0x6f8] sm:$0xff]
    %v470 = vld [vmem:[#allocation5 + $0x700] sm:$0xff]
    %v471 = vld [vmem:[#allocation5 + $0x708] sm:$0xff]
    %v472 = vld [vmem:[#allocation5 + $0x710] sm:$0xff]
    %v473 = vld [vmem:[#allocation5 + $0x718] sm:$0xff]
    %v474 = vld [vmem:[#allocation5 + $0x720] sm:$0xff]
    %v475 = vld [vmem:[#allocation5 + $0x728] sm:$0xff]
    %v476 = vld [vmem:[#allocation5 + $0x730] sm:$0xff]
    %v477 = vld [vmem:[#allocation5 + $0x738] sm:$0xff]
    %v478 = vld [vmem:[#allocation5 + $0x740] sm:$0xff]
    %v479 = vld [vmem:[#allocation5 + $0x748] sm:$0xff]
    %v480 = vld [vmem:[#allocation5 + $0x750] sm:$0xff]
    %v481 = vld [vmem:[#allocation5 + $0x758] sm:$0xff]
    %v482 = vld [vmem:[#allocation5 + $0x760] sm:$0xff]
    %v483 = vld [vmem:[#allocation5 + $0x768] sm:$0xff]
    %v484 = vld [vmem:[#allocation5 + $0x770] sm:$0xff]
    %v485 = vld [vmem:[#allocation5 + $0x778] sm:$0xff]
    %v486 = vld [vmem:[#allocation5 + $0x780] sm:$0xff]
    %v487 = vld [vmem:[#allocation5 + $0x788] sm:$0xff]
    %v488 = vld [vmem:[#allocation5 + $0x790] sm:$0xff]
    %v489 = vld [vmem:[#allocation5 + $0x798] sm:$0xff]
    %v490 = vld [vmem:[#allocation5 + $0x7a0] sm:$0xff]
    %v491 = vld [vmem:[#allocation5 + $0x7a8] sm:$0xff]
    %v492 = vld [vmem:[#allocation5 + $0x7b0] sm:$0xff]
    %v493 = vld [vmem:[#allocation5 + $0x7b8] sm:$0xff]
    %v494 = vld [vmem:[#allocation5 + $0x7c0] sm:$0xff]
    %v495 = vld [vmem:[#allocation5 + $0x7c8] sm:$0xff]
    %v496 = vld [vmem:[#allocation5 + $0x7d0] sm:$0xff]
    %v497 = vld [vmem:[#allocation5 + $0x7d8] sm:$0xff]
    %v498 = vld [vmem:[#allocation5 + $0x7e0] sm:$0xff]
    %v499 = vld [vmem:[#allocation5 + $0x7e8] sm:$0xff]
    %v500 = vld [vmem:[#allocation5 + $0x7f0] sm:$0xff]
    %v501 = vld [vmem:[#allocation5 + $0x7f8] sm:$0xff]
    %v502 = vld [vmem:[#allocation7] sm:$0xf]
    %v504 = vlaneseq
    %v505 = vshrl.u32 %v504, 7
    %v506 = vsub.s32 0, %v505
    %v507 = vrot.slane %v502, %v506
    %v508 = vlaneseq
    %v509 = vshrl.u32 %v508, 7
    %v510 = vsub.s32 1, %v509
    %v511 = vrot.slane %v502, %v510
    %v512 = vlaneseq
    %v513 = vshrl.u32 %v512, 7
    %v514 = vsub.s32 2, %v513
    %v515 = vrot.slane %v502, %v514
    %v516 = vlaneseq
    %v517 = vshrl.u32 %v516, 7
    %v518 = vsub.s32 3, %v517
    %v519 = vrot.slane %v502, %v518
    %v780 = vunpack.c.l.b16 %v246
    %v781 = vunpack.c.h.b16 %v246
    %v782 = vunpack.c.l.b16 %v247
    %v783 = vunpack.c.h.b16 %v247
    %v784 = vunpack.c.l.b16 %v248
    %v785 = vunpack.c.h.b16 %v248
    %v786 = vunpack.c.l.b16 %v249
    %v787 = vunpack.c.h.b16 %v249
    %v788 = vunpack.c.l.b16 %v250
    %v789 = vunpack.c.h.b16 %v250
    %v790 = vunpack.c.l.b16 %v251
    %v791 = vunpack.c.h.b16 %v251
    %v792 = vunpack.c.l.b16 %v252
    %v793 = vunpack.c.h.b16 %v252
    %v794 = vunpack.c.l.b16 %v253
    %v795 = vunpack.c.h.b16 %v253
    %v796 = vunpack.c.l.b16 %v254
    %v797 = vunpack.c.h.b16 %v254
    %v798 = vunpack.c.l.b16 %v255
    %v799 = vunpack.c.h.b16 %v255
    %v800 = vunpack.c.l.b16 %v256
    %v801 = vunpack.c.h.b16 %v256
    %v802 = vunpack.c.l.b16 %v257
    %v803 = vunpack.c.h.b16 %v257
    %v804 = vunpack.c.l.b16 %v258
    %v805 = vunpack.c.h.b16 %v258
    %v806 = vunpack.c.l.b16 %v259
    %v807 = vunpack.c.h.b16 %v259
    %v808 = vunpack.c.l.b16 %v260
    %v809 = vunpack.c.h.b16 %v260
    %v810 = vunpack.c.l.b16 %v261
    %v811 = vunpack.c.h.b16 %v261
    %v812 = vunpack.c.l.b16 %v262
    %v813 = vunpack.c.h.b16 %v262
    %v814 = vunpack.c.l.b16 %v263
    %v815 = vunpack.c.h.b16 %v263
    %v816 = vunpack.c.l.b16 %v264
    %v817 = vunpack.c.h.b16 %v264
    %v818 = vunpack.c.l.b16 %v265
    %v819 = vunpack.c.h.b16 %v265
    %v820 = vunpack.c.l.b16 %v266
    %v821 = vunpack.c.h.b16 %v266
    %v822 = vunpack.c.l.b16 %v267
    %v823 = vunpack.c.h.b16 %v267
    %v824 = vunpack.c.l.b16 %v268
    %v825 = vunpack.c.h.b16 %v268
    %v826 = vunpack.c.l.b16 %v269
    %v827 = vunpack.c.h.b16 %v269
    %v828 = vunpack.c.l.b16 %v270
    %v829 = vunpack.c.h.b16 %v270
    %v830 = vunpack.c.l.b16 %v271
    %v831 = vunpack.c.h.b16 %v271
    %v832 = vunpack.c.l.b16 %v272
    %v833 = vunpack.c.h.b16 %v272
    %v834 = vunpack.c.l.b16 %v273
    %v835 = vunpack.c.h.b16 %v273
    %v836 = vunpack.c.l.b16 %v274
    %v837 = vunpack.c.h.b16 %v274
    %v838 = vunpack.c.l.b16 %v275
    %v839 = vunpack.c.h.b16 %v275
    %v840 = vunpack.c.l.b16 %v276
    %v841 = vunpack.c.h.b16 %v276
    %v842 = vunpack.c.l.b16 %v277
    %v843 = vunpack.c.h.b16 %v277
    %v844 = vunpack.c.l.b16 %v278
    %v845 = vunpack.c.h.b16 %v278
    %v846 = vunpack.c.l.b16 %v279
    %v847 = vunpack.c.h.b16 %v279
    %v848 = vunpack.c.l.b16 %v280
    %v849 = vunpack.c.h.b16 %v280
    %v850 = vunpack.c.l.b16 %v281
    %v851 = vunpack.c.h.b16 %v281
    %v852 = vunpack.c.l.b16 %v282
    %v853 = vunpack.c.h.b16 %v282
    %v854 = vunpack.c.l.b16 %v283
    %v855 = vunpack.c.h.b16 %v283
    %v856 = vunpack.c.l.b16 %v284
    %v857 = vunpack.c.h.b16 %v284
    %v858 = vunpack.c.l.b16 %v285
    %v859 = vunpack.c.h.b16 %v285
    %v860 = vunpack.c.l.b16 %v286
    %v861 = vunpack.c.h.b16 %v286
    %v862 = vunpack.c.l.b16 %v287
    %v863 = vunpack.c.h.b16 %v287
    %v864 = vunpack.c.l.b16 %v288
    %v865 = vunpack.c.h.b16 %v288
    %v866 = vunpack.c.l.b16 %v289
    %v867 = vunpack.c.h.b16 %v289
    %v868 = vunpack.c.l.b16 %v290
    %v869 = vunpack.c.h.b16 %v290
    %v870 = vunpack.c.l.b16 %v291
    %v871 = vunpack.c.h.b16 %v291
    %v872 = vunpack.c.l.b16 %v292
    %v873 = vunpack.c.h.b16 %v292
    %v874 = vunpack.c.l.b16 %v293
    %v875 = vunpack.c.h.b16 %v293
    %v876 = vunpack.c.l.b16 %v294
    %v877 = vunpack.c.h.b16 %v294
    %v878 = vunpack.c.l.b16 %v295
    %v879 = vunpack.c.h.b16 %v295
    %v880 = vunpack.c.l.b16 %v296
    %v881 = vunpack.c.h.b16 %v296
    %v882 = vunpack.c.l.b16 %v297
    %v883 = vunpack.c.h.b16 %v297
    %v884 = vunpack.c.l.b16 %v298
    %v885 = vunpack.c.h.b16 %v298
    %v886 = vunpack.c.l.b16 %v299
    %v887 = vunpack.c.h.b16 %v299
    %v888 = vunpack.c.l.b16 %v300
    %v889 = vunpack.c.h.b16 %v300
    %v890 = vunpack.c.l.b16 %v301
    %v891 = vunpack.c.h.b16 %v301
    %v892 = vunpack.c.l.b16 %v302
    %v893 = vunpack.c.h.b16 %v302
    %v894 = vunpack.c.l.b16 %v303
    %v895 = vunpack.c.h.b16 %v303
    %v896 = vunpack.c.l.b16 %v304
    %v897 = vunpack.c.h.b16 %v304
    %v898 = vunpack.c.l.b16 %v305
    %v899 = vunpack.c.h.b16 %v305
    %v900 = vunpack.c.l.b16 %v306
    %v901 = vunpack.c.h.b16 %v306
    %v902 = vunpack.c.l.b16 %v307
    %v903 = vunpack.c.h.b16 %v307
    %v904 = vunpack.c.l.b16 %v308
    %v905 = vunpack.c.h.b16 %v308
    %v906 = vunpack.c.l.b16 %v309
    %v907 = vunpack.c.h.b16 %v309
    %v908 = vunpack.c.l.b16 %v310
    %v909 = vunpack.c.h.b16 %v310
    %v910 = vunpack.c.l.b16 %v311
    %v911 = vunpack.c.h.b16 %v311
    %v912 = vunpack.c.l.b16 %v312
    %v913 = vunpack.c.h.b16 %v312
    %v914 = vunpack.c.l.b16 %v313
    %v915 = vunpack.c.h.b16 %v313
    %v916 = vunpack.c.l.b16 %v314
    %v917 = vunpack.c.h.b16 %v314
    %v918 = vunpack.c.l.b16 %v315
    %v919 = vunpack.c.h.b16 %v315
    %v920 = vunpack.c.l.b16 %v316
    %v921 = vunpack.c.h.b16 %v316
    %v922 = vunpack.c.l.b16 %v317
    %v923 = vunpack.c.h.b16 %v317
    %v924 = vunpack.c.l.b16 %v318
    %v925 = vunpack.c.h.b16 %v318
    %v926 = vunpack.c.l.b16 %v319
    %v927 = vunpack.c.h.b16 %v319
    %v928 = vunpack.c.l.b16 %v320
    %v929 = vunpack.c.h.b16 %v320
    %v930 = vunpack.c.l.b16 %v321
    %v931 = vunpack.c.h.b16 %v321
    %v932 = vunpack.c.l.b16 %v322
    %v933 = vunpack.c.h.b16 %v322
    %v934 = vunpack.c.l.b16 %v323
    %v935 = vunpack.c.h.b16 %v323
    %v936 = vunpack.c.l.b16 %v324
    %v937 = vunpack.c.h.b16 %v324
    %v938 = vunpack.c.l.b16 %v325
    %v939 = vunpack.c.h.b16 %v325
    %v940 = vunpack.c.l.b16 %v326
    %v941 = vunpack.c.h.b16 %v326
    %v942 = vunpack.c.l.b16 %v327
    %v943 = vunpack.c.h.b16 %v327
    %v944 = vunpack.c.l.b16 %v328
    %v945 = vunpack.c.h.b16 %v328
    %v946 = vunpack.c.l.b16 %v329
    %v947 = vunpack.c.h.b16 %v329
    %v948 = vunpack.c.l.b16 %v330
    %v949 = vunpack.c.h.b16 %v330
    %v950 = vunpack.c.l.b16 %v331
    %v951 = vunpack.c.h.b16 %v331
    %v952 = vunpack.c.l.b16 %v332
    %v953 = vunpack.c.h.b16 %v332
    %v954 = vunpack.c.l.b16 %v333
    %v955 = vunpack.c.h.b16 %v333
    %v956 = vunpack.c.l.b16 %v334
    %v957 = vunpack.c.h.b16 %v334
    %v958 = vunpack.c.l.b16 %v335
    %v959 = vunpack.c.h.b16 %v335
    %v960 = vunpack.c.l.b16 %v336
    %v961 = vunpack.c.h.b16 %v336
    %v962 = vunpack.c.l.b16 %v337
    %v963 = vunpack.c.h.b16 %v337
    %v964 = vunpack.c.l.b16 %v338
    %v965 = vunpack.c.h.b16 %v338
    %v966 = vunpack.c.l.b16 %v339
    %v967 = vunpack.c.h.b16 %v339
    %v968 = vunpack.c.l.b16 %v340
    %v969 = vunpack.c.h.b16 %v340
    %v970 = vunpack.c.l.b16 %v341
    %v971 = vunpack.c.h.b16 %v341
    %v972 = vunpack.c.l.b16 %v342
    %v973 = vunpack.c.h.b16 %v342
    %v974 = vunpack.c.l.b16 %v343
    %v975 = vunpack.c.h.b16 %v343
    %v976 = vunpack.c.l.b16 %v344
    %v977 = vunpack.c.h.b16 %v344
    %v978 = vunpack.c.l.b16 %v345
    %v979 = vunpack.c.h.b16 %v345
    %v980 = vunpack.c.l.b16 %v346
    %v981 = vunpack.c.h.b16 %v346
    %v982 = vunpack.c.l.b16 %v347
    %v983 = vunpack.c.h.b16 %v347
    %v984 = vunpack.c.l.b16 %v348
    %v985 = vunpack.c.h.b16 %v348
    %v986 = vunpack.c.l.b16 %v349
    %v987 = vunpack.c.h.b16 %v349
    %v988 = vunpack.c.l.b16 %v350
    %v989 = vunpack.c.h.b16 %v350
    %v990 = vunpack.c.l.b16 %v351
    %v991 = vunpack.c.h.b16 %v351
    %v992 = vunpack.c.l.b16 %v352
    %v993 = vunpack.c.h.b16 %v352
    %v994 = vunpack.c.l.b16 %v353
    %v995 = vunpack.c.h.b16 %v353
    %v996 = vunpack.c.l.b16 %v354
    %v997 = vunpack.c.h.b16 %v354
    %v998 = vunpack.c.l.b16 %v355
    %v999 = vunpack.c.h.b16 %v355
    %v1000 = vunpack.c.l.b16 %v356
    %v1001 = vunpack.c.h.b16 %v356
    %v1002 = vunpack.c.l.b16 %v357
    %v1003 = vunpack.c.h.b16 %v357
    %v1004 = vunpack.c.l.b16 %v358
    %v1005 = vunpack.c.h.b16 %v358
    %v1006 = vunpack.c.l.b16 %v359
    %v1007 = vunpack.c.h.b16 %v359
    %v1008 = vunpack.c.l.b16 %v360
    %v1009 = vunpack.c.h.b16 %v360
    %v1010 = vunpack.c.l.b16 %v361
    %v1011 = vunpack.c.h.b16 %v361
    %v1012 = vunpack.c.l.b16 %v362
    %v1013 = vunpack.c.h.b16 %v362
    %v1014 = vunpack.c.l.b16 %v363
    %v1015 = vunpack.c.h.b16 %v363
    %v1016 = vunpack.c.l.b16 %v364
    %v1017 = vunpack.c.h.b16 %v364
    %v1018 = vunpack.c.l.b16 %v365
    %v1019 = vunpack.c.h.b16 %v365
    %v1020 = vunpack.c.l.b16 %v366
    %v1021 = vunpack.c.h.b16 %v366
    %v1022 = vunpack.c.l.b16 %v367
    %v1023 = vunpack.c.h.b16 %v367
    %v1024 = vunpack.c.l.b16 %v368
    %v1025 = vunpack.c.h.b16 %v368
    %v1026 = vunpack.c.l.b16 %v369
    %v1027 = vunpack.c.h.b16 %v369
    %v1028 = vunpack.c.l.b16 %v370
    %v1029 = vunpack.c.h.b16 %v370
    %v1030 = vunpack.c.l.b16 %v371
    %v1031 = vunpack.c.h.b16 %v371
    %v1032 = vunpack.c.l.b16 %v372
    %v1033 = vunpack.c.h.b16 %v372
    %v1034 = vunpack.c.l.b16 %v373
    %v1035 = vunpack.c.h.b16 %v373
    %v1036 = vunpack.c.l.b16 %v374
    %v1037 = vunpack.c.h.b16 %v374
    %v1038 = vunpack.c.l.b16 %v375
    %v1039 = vunpack.c.h.b16 %v375
    %v1040 = vunpack.c.l.b16 %v376
    %v1041 = vunpack.c.h.b16 %v376
    %v1042 = vunpack.c.l.b16 %v377
    %v1043 = vunpack.c.h.b16 %v377
    %v1044 = vunpack.c.l.b16 %v378
    %v1045 = vunpack.c.h.b16 %v378
    %v1046 = vunpack.c.l.b16 %v379
    %v1047 = vunpack.c.h.b16 %v379
    %v1048 = vunpack.c.l.b16 %v380
    %v1049 = vunpack.c.h.b16 %v380
    %v1050 = vunpack.c.l.b16 %v381
    %v1051 = vunpack.c.h.b16 %v381
    %v1052 = vunpack.c.l.b16 %v382
    %v1053 = vunpack.c.h.b16 %v382
    %v1054 = vunpack.c.l.b16 %v383
    %v1055 = vunpack.c.h.b16 %v383
    %v1056 = vunpack.c.l.b16 %v384
    %v1057 = vunpack.c.h.b16 %v384
    %v1058 = vunpack.c.l.b16 %v385
    %v1059 = vunpack.c.h.b16 %v385
    %v1060 = vunpack.c.l.b16 %v386
    %v1061 = vunpack.c.h.b16 %v386
    %v1062 = vunpack.c.l.b16 %v387
    %v1063 = vunpack.c.h.b16 %v387
    %v1064 = vunpack.c.l.b16 %v388
    %v1065 = vunpack.c.h.b16 %v388
    %v1066 = vunpack.c.l.b16 %v389
    %v1067 = vunpack.c.h.b16 %v389
    %v1068 = vunpack.c.l.b16 %v390
    %v1069 = vunpack.c.h.b16 %v390
    %v1070 = vunpack.c.l.b16 %v391
    %v1071 = vunpack.c.h.b16 %v391
    %v1072 = vunpack.c.l.b16 %v392
    %v1073 = vunpack.c.h.b16 %v392
    %v1074 = vunpack.c.l.b16 %v393
    %v1075 = vunpack.c.h.b16 %v393
    %v1076 = vunpack.c.l.b16 %v394
    %v1077 = vunpack.c.h.b16 %v394
    %v1078 = vunpack.c.l.b16 %v395
    %v1079 = vunpack.c.h.b16 %v395
    %v1080 = vunpack.c.l.b16 %v396
    %v1081 = vunpack.c.h.b16 %v396
    %v1082 = vunpack.c.l.b16 %v397
    %v1083 = vunpack.c.h.b16 %v397
    %v1084 = vunpack.c.l.b16 %v398
    %v1085 = vunpack.c.h.b16 %v398
    %v1086 = vunpack.c.l.b16 %v399
    %v1087 = vunpack.c.h.b16 %v399
    %v1088 = vunpack.c.l.b16 %v400
    %v1089 = vunpack.c.h.b16 %v400
    %v1090 = vunpack.c.l.b16 %v401
    %v1091 = vunpack.c.h.b16 %v401
    %v1092 = vunpack.c.l.b16 %v402
    %v1093 = vunpack.c.h.b16 %v402
    %v1094 = vunpack.c.l.b16 %v403
    %v1095 = vunpack.c.h.b16 %v403
    %v1096 = vunpack.c.l.b16 %v404
    %v1097 = vunpack.c.h.b16 %v404
    %v1098 = vunpack.c.l.b16 %v405
    %v1099 = vunpack.c.h.b16 %v405
    %v1100 = vunpack.c.l.b16 %v406
    %v1101 = vunpack.c.h.b16 %v406
    %v1102 = vunpack.c.l.b16 %v407
    %v1103 = vunpack.c.h.b16 %v407
    %v1104 = vunpack.c.l.b16 %v408
    %v1105 = vunpack.c.h.b16 %v408
    %v1106 = vunpack.c.l.b16 %v409
    %v1107 = vunpack.c.h.b16 %v409
    %v1108 = vunpack.c.l.b16 %v410
    %v1109 = vunpack.c.h.b16 %v410
    %v1110 = vunpack.c.l.b16 %v411
    %v1111 = vunpack.c.h.b16 %v411
    %v1112 = vunpack.c.l.b16 %v412
    %v1113 = vunpack.c.h.b16 %v412
    %v1114 = vunpack.c.l.b16 %v413
    %v1115 = vunpack.c.h.b16 %v413
    %v1116 = vunpack.c.l.b16 %v414
    %v1117 = vunpack.c.h.b16 %v414
    %v1118 = vunpack.c.l.b16 %v415
    %v1119 = vunpack.c.h.b16 %v415
    %v1120 = vunpack.c.l.b16 %v416
    %v1121 = vunpack.c.h.b16 %v416
    %v1122 = vunpack.c.l.b16 %v417
    %v1123 = vunpack.c.h.b16 %v417
    %v1124 = vunpack.c.l.b16 %v418
    %v1125 = vunpack.c.h.b16 %v418
    %v1126 = vunpack.c.l.b16 %v419
    %v1127 = vunpack.c.h.b16 %v419
    %v1128 = vunpack.c.l.b16 %v420
    %v1129 = vunpack.c.h.b16 %v420
    %v1130 = vunpack.c.l.b16 %v421
    %v1131 = vunpack.c.h.b16 %v421
    %v1132 = vunpack.c.l.b16 %v422
    %v1133 = vunpack.c.h.b16 %v422
    %v1134 = vunpack.c.l.b16 %v423
    %v1135 = vunpack.c.h.b16 %v423
    %v1136 = vunpack.c.l.b16 %v424
    %v1137 = vunpack.c.h.b16 %v424
    %v1138 = vunpack.c.l.b16 %v425
    %v1139 = vunpack.c.h.b16 %v425
    %v1140 = vunpack.c.l.b16 %v426
    %v1141 = vunpack.c.h.b16 %v426
    %v1142 = vunpack.c.l.b16 %v427
    %v1143 = vunpack.c.h.b16 %v427
    %v1144 = vunpack.c.l.b16 %v428
    %v1145 = vunpack.c.h.b16 %v428
    %v1146 = vunpack.c.l.b16 %v429
    %v1147 = vunpack.c.h.b16 %v429
    %v1148 = vunpack.c.l.b16 %v430
    %v1149 = vunpack.c.h.b16 %v430
    %v1150 = vunpack.c.l.b16 %v431
    %v1151 = vunpack.c.h.b16 %v431
    %v1152 = vunpack.c.l.b16 %v432
    %v1153 = vunpack.c.h.b16 %v432
    %v1154 = vunpack.c.l.b16 %v433
    %v1155 = vunpack.c.h.b16 %v433
    %v1156 = vunpack.c.l.b16 %v434
    %v1157 = vunpack.c.h.b16 %v434
    %v1158 = vunpack.c.l.b16 %v435
    %v1159 = vunpack.c.h.b16 %v435
    %v1160 = vunpack.c.l.b16 %v436
    %v1161 = vunpack.c.h.b16 %v436
    %v1162 = vunpack.c.l.b16 %v437
    %v1163 = vunpack.c.h.b16 %v437
    %v1164 = vunpack.c.l.b16 %v438
    %v1165 = vunpack.c.h.b16 %v438
    %v1166 = vunpack.c.l.b16 %v439
    %v1167 = vunpack.c.h.b16 %v439
    %v1168 = vunpack.c.l.b16 %v440
    %v1169 = vunpack.c.h.b16 %v440
    %v1170 = vunpack.c.l.b16 %v441
    %v1171 = vunpack.c.h.b16 %v441
    %v1172 = vunpack.c.l.b16 %v442
    %v1173 = vunpack.c.h.b16 %v442
    %v1174 = vunpack.c.l.b16 %v443
    %v1175 = vunpack.c.h.b16 %v443
    %v1176 = vunpack.c.l.b16 %v444
    %v1177 = vunpack.c.h.b16 %v444
    %v1178 = vunpack.c.l.b16 %v445
    %v1179 = vunpack.c.h.b16 %v445
    %v1180 = vunpack.c.l.b16 %v446
    %v1181 = vunpack.c.h.b16 %v446
    %v1182 = vunpack.c.l.b16 %v447
    %v1183 = vunpack.c.h.b16 %v447
    %v1184 = vunpack.c.l.b16 %v448
    %v1185 = vunpack.c.h.b16 %v448
    %v1186 = vunpack.c.l.b16 %v449
    %v1187 = vunpack.c.h.b16 %v449
    %v1188 = vunpack.c.l.b16 %v450
    %v1189 = vunpack.c.h.b16 %v450
    %v1190 = vunpack.c.l.b16 %v451
    %v1191 = vunpack.c.h.b16 %v451
    %v1192 = vunpack.c.l.b16 %v452
    %v1193 = vunpack.c.h.b16 %v452
    %v1194 = vunpack.c.l.b16 %v453
    %v1195 = vunpack.c.h.b16 %v453
    %v1196 = vunpack.c.l.b16 %v454
    %v1197 = vunpack.c.h.b16 %v454
    %v1198 = vunpack.c.l.b16 %v455
    %v1199 = vunpack.c.h.b16 %v455
    %v1200 = vunpack.c.l.b16 %v456
    %v1201 = vunpack.c.h.b16 %v456
    %v1202 = vunpack.c.l.b16 %v457
    %v1203 = vunpack.c.h.b16 %v457
    %v1204 = vunpack.c.l.b16 %v458
    %v1205 = vunpack.c.h.b16 %v458
    %v1206 = vunpack.c.l.b16 %v459
    %v1207 = vunpack.c.h.b16 %v459
    %v1208 = vunpack.c.l.b16 %v460
    %v1209 = vunpack.c.h.b16 %v460
    %v1210 = vunpack.c.l.b16 %v461
    %v1211 = vunpack.c.h.b16 %v461
    %v1212 = vunpack.c.l.b16 %v462
    %v1213 = vunpack.c.h.b16 %v462
    %v1214 = vunpack.c.l.b16 %v463
    %v1215 = vunpack.c.h.b16 %v463
    %v1216 = vunpack.c.l.b16 %v464
    %v1217 = vunpack.c.h.b16 %v464
    %v1218 = vunpack.c.l.b16 %v465
    %v1219 = vunpack.c.h.b16 %v465
    %v1220 = vunpack.c.l.b16 %v466
    %v1221 = vunpack.c.h.b16 %v466
    %v1222 = vunpack.c.l.b16 %v467
    %v1223 = vunpack.c.h.b16 %v467
    %v1224 = vunpack.c.l.b16 %v468
    %v1225 = vunpack.c.h.b16 %v468
    %v1226 = vunpack.c.l.b16 %v469
    %v1227 = vunpack.c.h.b16 %v469
    %v1228 = vunpack.c.l.b16 %v470
    %v1229 = vunpack.c.h.b16 %v470
    %v1230 = vunpack.c.l.b16 %v471
    %v1231 = vunpack.c.h.b16 %v471
    %v1232 = vunpack.c.l.b16 %v472
    %v1233 = vunpack.c.h.b16 %v472
    %v1234 = vunpack.c.l.b16 %v473
    %v1235 = vunpack.c.h.b16 %v473
    %v1236 = vunpack.c.l.b16 %v474
    %v1237 = vunpack.c.h.b16 %v474
    %v1238 = vunpack.c.l.b16 %v475
    %v1239 = vunpack.c.h.b16 %v475
    %v1240 = vunpack.c.l.b16 %v476
    %v1241 = vunpack.c.h.b16 %v476
    %v1242 = vunpack.c.l.b16 %v477
    %v1243 = vunpack.c.h.b16 %v477
    %v1244 = vunpack.c.l.b16 %v478
    %v1245 = vunpack.c.h.b16 %v478
    %v1246 = vunpack.c.l.b16 %v479
    %v1247 = vunpack.c.h.b16 %v479
    %v1248 = vunpack.c.l.b16 %v480
    %v1249 = vunpack.c.h.b16 %v480
    %v1250 = vunpack.c.l.b16 %v481
    %v1251 = vunpack.c.h.b16 %v481
    %v1252 = vunpack.c.l.b16 %v482
    %v1253 = vunpack.c.h.b16 %v482
    %v1254 = vunpack.c.l.b16 %v483
    %v1255 = vunpack.c.h.b16 %v483
    %v1256 = vunpack.c.l.b16 %v484
    %v1257 = vunpack.c.h.b16 %v484
    %v1258 = vunpack.c.l.b16 %v485
    %v1259 = vunpack.c.h.b16 %v485
    %v1260 = vunpack.c.l.b16 %v486
    %v1261 = vunpack.c.h.b16 %v486
    %v1262 = vunpack.c.l.b16 %v487
    %v1263 = vunpack.c.h.b16 %v487
    %v1264 = vunpack.c.l.b16 %v488
    %v1265 = vunpack.c.h.b16 %v488
    %v1266 = vunpack.c.l.b16 %v489
    %v1267 = vunpack.c.h.b16 %v489
    %v1268 = vunpack.c.l.b16 %v490
    %v1269 = vunpack.c.h.b16 %v490
    %v1270 = vunpack.c.l.b16 %v491
    %v1271 = vunpack.c.h.b16 %v491
    %v1272 = vunpack.c.l.b16 %v492
    %v1273 = vunpack.c.h.b16 %v492
    %v1274 = vunpack.c.l.b16 %v493
    %v1275 = vunpack.c.h.b16 %v493
    %v1276 = vunpack.c.l.b16 %v494
    %v1277 = vunpack.c.h.b16 %v494
    %v1278 = vunpack.c.l.b16 %v495
    %v1279 = vunpack.c.h.b16 %v495
    %v1280 = vunpack.c.l.b16 %v496
    %v1281 = vunpack.c.h.b16 %v496
    %v1282 = vunpack.c.l.b16 %v497
    %v1283 = vunpack.c.h.b16 %v497
    %v1284 = vunpack.c.l.b16 %v498
    %v1285 = vunpack.c.h.b16 %v498
    %v1286 = vunpack.c.l.b16 %v499
    %v1287 = vunpack.c.h.b16 %v499
    %v1288 = vunpack.c.l.b16 %v500
    %v1289 = vunpack.c.h.b16 %v500
    %v1290 = vunpack.c.l.b16 %v501
    %v1291 = vunpack.c.h.b16 %v501
    %v1292 = vpack.c.b16 %v784, %v780
    %v1293 = vpack.c.b16 %v785, %v781
    %v1294 = vpack.c.b16 %v786, %v782
    %v1295 = vpack.c.b16 %v787, %v783
    %v1296 = vpack.c.b16 %v792, %v788
    %v1297 = vpack.c.b16 %v793, %v789
    %v1298 = vpack.c.b16 %v794, %v790
    %v1299 = vpack.c.b16 %v795, %v791
    %v1300 = vpack.c.b16 %v800, %v796
    %v1301 = vpack.c.b16 %v801, %v797
    %v1302 = vpack.c.b16 %v802, %v798
    %v1303 = vpack.c.b16 %v803, %v799
    %v1304 = vpack.c.b16 %v808, %v804
    %v1305 = vpack.c.b16 %v809, %v805
    %v1306 = vpack.c.b16 %v810, %v806
    %v1307 = vpack.c.b16 %v811, %v807
    %v1308 = vpack.c.b16 %v816, %v812
    %v1309 = vpack.c.b16 %v817, %v813
    %v1310 = vpack.c.b16 %v818, %v814
    %v1311 = vpack.c.b16 %v819, %v815
    %v1312 = vpack.c.b16 %v824, %v820
    %v1313 = vpack.c.b16 %v825, %v821
    %v1314 = vpack.c.b16 %v826, %v822
    %v1315 = vpack.c.b16 %v827, %v823
    %v1316 = vpack.c.b16 %v832, %v828
    %v1317 = vpack.c.b16 %v833, %v829
    %v1318 = vpack.c.b16 %v834, %v830
    %v1319 = vpack.c.b16 %v835, %v831
    %v1320 = vpack.c.b16 %v840, %v836
    %v1321 = vpack.c.b16 %v841, %v837
    %v1322 = vpack.c.b16 %v842, %v838
    %v1323 = vpack.c.b16 %v843, %v839
    %v1324 = vpack.c.b16 %v848, %v844
    %v1325 = vpack.c.b16 %v849, %v845
    %v1326 = vpack.c.b16 %v850, %v846
    %v1327 = vpack.c.b16 %v851, %v847
    %v1328 = vpack.c.b16 %v856, %v852
    %v1329 = vpack.c.b16 %v857, %v853
    %v1330 = vpack.c.b16 %v858, %v854
    %v1331 = vpack.c.b16 %v859, %v855
    %v1332 = vpack.c.b16 %v864, %v860
    %v1333 = vpack.c.b16 %v865, %v861
    %v1334 = vpack.c.b16 %v866, %v862
    %v1335 = vpack.c.b16 %v867, %v863
    %v1336 = vpack.c.b16 %v872, %v868
    %v1337 = vpack.c.b16 %v873, %v869
    %v1338 = vpack.c.b16 %v874, %v870
    %v1339 = vpack.c.b16 %v875, %v871
    %v1340 = vpack.c.b16 %v880, %v876
    %v1341 = vpack.c.b16 %v881, %v877
    %v1342 = vpack.c.b16 %v882, %v878
    %v1343 = vpack.c.b16 %v883, %v879
    %v1344 = vpack.c.b16 %v888, %v884
    %v1345 = vpack.c.b16 %v889, %v885
    %v1346 = vpack.c.b16 %v890, %v886
    %v1347 = vpack.c.b16 %v891, %v887
    %v1348 = vpack.c.b16 %v896, %v892
    %v1349 = vpack.c.b16 %v897, %v893
    %v1350 = vpack.c.b16 %v898, %v894
    %v1351 = vpack.c.b16 %v899, %v895
    %v1352 = vpack.c.b16 %v904, %v900
    %v1353 = vpack.c.b16 %v905, %v901
    %v1354 = vpack.c.b16 %v906, %v902
    %v1355 = vpack.c.b16 %v907, %v903
    %v1356 = vpack.c.b16 %v912, %v908
    %v1357 = vpack.c.b16 %v913, %v909
    %v1358 = vpack.c.b16 %v914, %v910
    %v1359 = vpack.c.b16 %v915, %v911
    %v1360 = vpack.c.b16 %v920, %v916
    %v1361 = vpack.c.b16 %v921, %v917
    %v1362 = vpack.c.b16 %v922, %v918
    %v1363 = vpack.c.b16 %v923, %v919
    %v1364 = vpack.c.b16 %v928, %v924
    %v1365 = vpack.c.b16 %v929, %v925
    %v1366 = vpack.c.b16 %v930, %v926
    %v1367 = vpack.c.b16 %v931, %v927
    %v1368 = vpack.c.b16 %v936, %v932
    %v1369 = vpack.c.b16 %v937, %v933
    %v1370 = vpack.c.b16 %v938, %v934
    %v1371 = vpack.c.b16 %v939, %v935
    %v1372 = vpack.c.b16 %v944, %v940
    %v1373 = vpack.c.b16 %v945, %v941
    %v1374 = vpack.c.b16 %v946, %v942
    %v1375 = vpack.c.b16 %v947, %v943
    %v1376 = vpack.c.b16 %v952, %v948
    %v1377 = vpack.c.b16 %v953, %v949
    %v1378 = vpack.c.b16 %v954, %v950
    %v1379 = vpack.c.b16 %v955, %v951
    %v1380 = vpack.c.b16 %v960, %v956
    %v1381 = vpack.c.b16 %v961, %v957
    %v1382 = vpack.c.b16 %v962, %v958
    %v1383 = vpack.c.b16 %v963, %v959
    %v1384 = vpack.c.b16 %v968, %v964
    %v1385 = vpack.c.b16 %v969, %v965
    %v1386 = vpack.c.b16 %v970, %v966
    %v1387 = vpack.c.b16 %v971, %v967
    %v1388 = vpack.c.b16 %v976, %v972
    %v1389 = vpack.c.b16 %v977, %v973
    %v1390 = vpack.c.b16 %v978, %v974
    %v1391 = vpack.c.b16 %v979, %v975
    %v1392 = vpack.c.b16 %v984, %v980
    %v1393 = vpack.c.b16 %v985, %v981
    %v1394 = vpack.c.b16 %v986, %v982
    %v1395 = vpack.c.b16 %v987, %v983
    %v1396 = vpack.c.b16 %v992, %v988
    %v1397 = vpack.c.b16 %v993, %v989
    %v1398 = vpack.c.b16 %v994, %v990
    %v1399 = vpack.c.b16 %v995, %v991
    %v1400 = vpack.c.b16 %v1000, %v996
    %v1401 = vpack.c.b16 %v1001, %v997
    %v1402 = vpack.c.b16 %v1002, %v998
    %v1403 = vpack.c.b16 %v1003, %v999
    %v1404 = vpack.c.b16 %v1008, %v1004
    %v1405 = vpack.c.b16 %v1009, %v1005
    %v1406 = vpack.c.b16 %v1010, %v1006
    %v1407 = vpack.c.b16 %v1011, %v1007
    %v1408 = vpack.c.b16 %v1016, %v1012
    %v1409 = vpack.c.b16 %v1017, %v1013
    %v1410 = vpack.c.b16 %v1018, %v1014
    %v1411 = vpack.c.b16 %v1019, %v1015
    %v1412 = vpack.c.b16 %v1024, %v1020
    %v1413 = vpack.c.b16 %v1025, %v1021
    %v1414 = vpack.c.b16 %v1026, %v1022
    %v1415 = vpack.c.b16 %v1027, %v1023
    %v1416 = vpack.c.b16 %v1032, %v1028
    %v1417 = vpack.c.b16 %v1033, %v1029
    %v1418 = vpack.c.b16 %v1034, %v1030
    %v1419 = vpack.c.b16 %v1035, %v1031
    %v1420 = vpack.c.b16 %v1040, %v1036
    %v1421 = vpack.c.b16 %v1041, %v1037
    %v1422 = vpack.c.b16 %v1042, %v1038
    %v1423 = vpack.c.b16 %v1043, %v1039
    %v1424 = vpack.c.b16 %v1048, %v1044
    %v1425 = vpack.c.b16 %v1049, %v1045
    %v1426 = vpack.c.b16 %v1050, %v1046
    %v1427 = vpack.c.b16 %v1051, %v1047
    %v1428 = vpack.c.b16 %v1056, %v1052
    %v1429 = vpack.c.b16 %v1057, %v1053
    %v1430 = vpack.c.b16 %v1058, %v1054
    %v1431 = vpack.c.b16 %v1059, %v1055
    %v1432 = vpack.c.b16 %v1064, %v1060
    %v1433 = vpack.c.b16 %v1065, %v1061
    %v1434 = vpack.c.b16 %v1066, %v1062
    %v1435 = vpack.c.b16 %v1067, %v1063
    %v1436 = vpack.c.b16 %v1072, %v1068
    %v1437 = vpack.c.b16 %v1073, %v1069
    %v1438 = vpack.c.b16 %v1074, %v1070
    %v1439 = vpack.c.b16 %v1075, %v1071
    %v1440 = vpack.c.b16 %v1080, %v1076
    %v1441 = vpack.c.b16 %v1081, %v1077
    %v1442 = vpack.c.b16 %v1082, %v1078
    %v1443 = vpack.c.b16 %v1083, %v1079
    %v1444 = vpack.c.b16 %v1088, %v1084
    %v1445 = vpack.c.b16 %v1089, %v1085
    %v1446 = vpack.c.b16 %v1090, %v1086
    %v1447 = vpack.c.b16 %v1091, %v1087
    %v1448 = vpack.c.b16 %v1096, %v1092
    %v1449 = vpack.c.b16 %v1097, %v1093
    %v1450 = vpack.c.b16 %v1098, %v1094
    %v1451 = vpack.c.b16 %v1099, %v1095
    %v1452 = vpack.c.b16 %v1104, %v1100
    %v1453 = vpack.c.b16 %v1105, %v1101
    %v1454 = vpack.c.b16 %v1106, %v1102
    %v1455 = vpack.c.b16 %v1107, %v1103
    %v1456 = vpack.c.b16 %v1112, %v1108
    %v1457 = vpack.c.b16 %v1113, %v1109
    %v1458 = vpack.c.b16 %v1114, %v1110
    %v1459 = vpack.c.b16 %v1115, %v1111
    %v1460 = vpack.c.b16 %v1120, %v1116
    %v1461 = vpack.c.b16 %v1121, %v1117
    %v1462 = vpack.c.b16 %v1122, %v1118
    %v1463 = vpack.c.b16 %v1123, %v1119
    %v1464 = vpack.c.b16 %v1128, %v1124
    %v1465 = vpack.c.b16 %v1129, %v1125
    %v1466 = vpack.c.b16 %v1130, %v1126
    %v1467 = vpack.c.b16 %v1131, %v1127
    %v1468 = vpack.c.b16 %v1136, %v1132
    %v1469 = vpack.c.b16 %v1137, %v1133
    %v1470 = vpack.c.b16 %v1138, %v1134
    %v1471 = vpack.c.b16 %v1139, %v1135
    %v1472 = vpack.c.b16 %v1144, %v1140
    %v1473 = vpack.c.b16 %v1145, %v1141
    %v1474 = vpack.c.b16 %v1146, %v1142
    %v1475 = vpack.c.b16 %v1147, %v1143
    %v1476 = vpack.c.b16 %v1152, %v1148
    %v1477 = vpack.c.b16 %v1153, %v1149
    %v1478 = vpack.c.b16 %v1154, %v1150
    %v1479 = vpack.c.b16 %v1155, %v1151
    %v1480 = vpack.c.b16 %v1160, %v1156
    %v1481 = vpack.c.b16 %v1161, %v1157
    %v1482 = vpack.c.b16 %v1162, %v1158
    %v1483 = vpack.c.b16 %v1163, %v1159
    %v1484 = vpack.c.b16 %v1168, %v1164
    %v1485 = vpack.c.b16 %v1169, %v1165
    %v1486 = vpack.c.b16 %v1170, %v1166
    %v1487 = vpack.c.b16 %v1171, %v1167
    %v1488 = vpack.c.b16 %v1176, %v1172
    %v1489 = vpack.c.b16 %v1177, %v1173
    %v1490 = vpack.c.b16 %v1178, %v1174
    %v1491 = vpack.c.b16 %v1179, %v1175
    %v1492 = vpack.c.b16 %v1184, %v1180
    %v1493 = vpack.c.b16 %v1185, %v1181
    %v1494 = vpack.c.b16 %v1186, %v1182
    %v1495 = vpack.c.b16 %v1187, %v1183
    %v1496 = vpack.c.b16 %v1192, %v1188
    %v1497 = vpack.c.b16 %v1193, %v1189
    %v1498 = vpack.c.b16 %v1194, %v1190
    %v1499 = vpack.c.b16 %v1195, %v1191
    %v1500 = vpack.c.b16 %v1200, %v1196
    %v1501 = vpack.c.b16 %v1201, %v1197
    %v1502 = vpack.c.b16 %v1202, %v1198
    %v1503 = vpack.c.b16 %v1203, %v1199
    %v1504 = vpack.c.b16 %v1208, %v1204
    %v1505 = vpack.c.b16 %v1209, %v1205
    %v1506 = vpack.c.b16 %v1210, %v1206
    %v1507 = vpack.c.b16 %v1211, %v1207
    %v1508 = vpack.c.b16 %v1216, %v1212
    %v1509 = vpack.c.b16 %v1217, %v1213
    %v1510 = vpack.c.b16 %v1218, %v1214
    %v1511 = vpack.c.b16 %v1219, %v1215
    %v1512 = vpack.c.b16 %v1224, %v1220
    %v1513 = vpack.c.b16 %v1225, %v1221
    %v1514 = vpack.c.b16 %v1226, %v1222
    %v1515 = vpack.c.b16 %v1227, %v1223
    %v1516 = vpack.c.b16 %v1232, %v1228
    %v1517 = vpack.c.b16 %v1233, %v1229
    %v1518 = vpack.c.b16 %v1234, %v1230
    %v1519 = vpack.c.b16 %v1235, %v1231
    %v1520 = vpack.c.b16 %v1240, %v1236
    %v1521 = vpack.c.b16 %v1241, %v1237
    %v1522 = vpack.c.b16 %v1242, %v1238
    %v1523 = vpack.c.b16 %v1243, %v1239
    %v1524 = vpack.c.b16 %v1248, %v1244
    %v1525 = vpack.c.b16 %v1249, %v1245
    %v1526 = vpack.c.b16 %v1250, %v1246
    %v1527 = vpack.c.b16 %v1251, %v1247
    %v1528 = vpack.c.b16 %v1256, %v1252
    %v1529 = vpack.c.b16 %v1257, %v1253
    %v1530 = vpack.c.b16 %v1258, %v1254
    %v1531 = vpack.c.b16 %v1259, %v1255
    %v1532 = vpack.c.b16 %v1264, %v1260
    %v1533 = vpack.c.b16 %v1265, %v1261
    %v1534 = vpack.c.b16 %v1266, %v1262
    %v1535 = vpack.c.b16 %v1267, %v1263
    %v1536 = vpack.c.b16 %v1272, %v1268
    %v1537 = vpack.c.b16 %v1273, %v1269
    %v1538 = vpack.c.b16 %v1274, %v1270
    %v1539 = vpack.c.b16 %v1275, %v1271
    %v1540 = vpack.c.b16 %v1280, %v1276
    %v1541 = vpack.c.b16 %v1281, %v1277
    %v1542 = vpack.c.b16 %v1282, %v1278
    %v1543 = vpack.c.b16 %v1283, %v1279
    %v1544 = vpack.c.b16 %v1288, %v1284
    %v1545 = vpack.c.b16 %v1289, %v1285
    %v1546 = vpack.c.b16 %v1290, %v1286
    %v1547 = vpack.c.b16 %v1291, %v1287
    %1804 = vmatprep.subr.bf16.mxu0 %v1321
    %1805 = vmatpush1.bf16.msra.mxu0 %v1320
    %1806 = vmatprep.subr.bf16.mxu0 %v1317
    %1807 = vmatpush1.bf16.msra.mxu0 %v1316
    %1808 = vmatprep.subr.bf16.mxu0 %v1313
    %1809 = vmatpush1.bf16.msra.mxu0 %v1312
    %1810 = vmatprep.subr.bf16.mxu0 %v1309
    %1811 = vmatpush1.bf16.msra.mxu0 %v1308
    %1812 = vmatprep.subr.bf16.mxu0 %v1305
    %1813 = vmatpush1.bf16.msra.mxu0 %v1304
    %1814 = vmatprep.subr.bf16.mxu0 %v1301
    %1815 = vmatpush1.bf16.msra.mxu0 %v1300
    %1816 = vmatprep.subr.bf16.mxu0 %v1297
    %1817 = vmatpush1.bf16.msra.mxu0 %v1296
    %1818 = vmatprep.subr.bf16.mxu0 %v1293
    %1819 = vmatpush1.bf16.msra.mxu0 %v1292
    %1820 = vmatprep.subr.bf16.mxu0 %v1353
    %1821 = vmatpush2.bf16.msra.mxu0 %v1352
    %1822 = vmatprep.subr.bf16.mxu0 %v1349
    %1823 = vmatpush2.bf16.msra.mxu0 %v1348
    %1824 = vmatprep.subr.bf16.mxu0 %v1345
    %1825 = vmatpush2.bf16.msra.mxu0 %v1344
    %1826 = vmatprep.subr.bf16.mxu0 %v1341
    %1827 = vmatpush2.bf16.msra.mxu0 %v1340
    %1828 = vmatprep.subr.bf16.mxu0 %v1337
    %1829 = vmatpush2.bf16.msra.mxu0 %v1336
    %1830 = vmatprep.subr.bf16.mxu0 %v1333
    %1831 = vmatpush2.bf16.msra.mxu0 %v1332
    %1832 = vmatprep.subr.bf16.mxu0 %v1329
    %1833 = vmatpush2.bf16.msra.mxu0 %v1328
    %1834 = vmatprep.subr.bf16.mxu0 %v1325
    %1835 = vmatpush2.bf16.msra.mxu0 %v1324
    %1836 = vmatprep.mubr.bf16.mxu0 %v183
    %1837 = vmatmul.mubr.bf16.gmra.mxu0 %v182
    %v1838 = vpop.f32.mrf.mxu0
    %v1839 = vadd.f32 %v507, %v1838
    %v1840 = vpop.f32.mrf.mxu0
    %v1841 = vadd.f32 %v511, %v1840
    %v1842 = vpop.f32.mrf.mxu0
    %v1843 = vadd.f32 %v507, %v1842
    %v1844 = vpop.f32.mrf.mxu0
    %v1845 = vadd.f32 %v511, %v1844
    %1846 = vmatprep.mubr.bf16.mxu0 %v191
    %1847 = vmatmul.mubr.bf16.gmra.mxu0 %v190
    %v1848 = vpop.f32.mrf.mxu0
    %v1849 = vadd.f32 %v507, %v1848
    %v1850 = vpop.f32.mrf.mxu0
    %v1851 = vadd.f32 %v511, %v1850
    %v1852 = vpop.f32.mrf.mxu0
    %v1853 = vadd.f32 %v507, %v1852
    %v1854 = vpop.f32.mrf.mxu0
    %v1855 = vadd.f32 %v511, %v1854
    %1856 = vmatprep.mubr.bf16.mxu0 %v199
    %1857 = vmatmul.mubr.bf16.gmra.mxu0 %v198
    %v1858 = vpop.f32.mrf.mxu0
    %v1859 = vadd.f32 %v507, %v1858
    %v1860 = vpop.f32.mrf.mxu0
    %v1861 = vadd.f32 %v511, %v1860
    %v1862 = vpop.f32.mrf.mxu0
    %v1863 = vadd.f32 %v507, %v1862
    %v1864 = vpop.f32.mrf.mxu0
    %v1865 = vadd.f32 %v511, %v1864
    %1866 = vmatprep.mubr.bf16.mxu0 %v207
    %1867 = vmatmul.mubr.bf16.gmra.mxu0 %v206
    %v1868 = vpop.f32.mrf.mxu0
    %v1869 = vadd.f32 %v507, %v1868
    %v1870 = vpop.f32.mrf.mxu0
    %v1871 = vadd.f32 %v511, %v1870
    %v1872 = vpop.f32.mrf.mxu0
    %v1873 = vadd.f32 %v507, %v1872
    %v1874 = vpop.f32.mrf.mxu0
    %v1875 = vadd.f32 %v511, %v1874
    %1876 = vmatprep.mubr.bf16.mxu0 %v215
    %1877 = vmatmul.mubr.bf16.gmra.mxu0 %v214
    %v1878 = vpop.f32.mrf.mxu0
    %v1879 = vadd.f32 %v507, %v1878
    %v1880 = vpop.f32.mrf.mxu0
    %v1881 = vadd.f32 %v511, %v1880
    %v1882 = vpop.f32.mrf.mxu0
    %v1883 = vadd.f32 %v507, %v1882
    %v1884 = vpop.f32.mrf.mxu0
    %v1885 = vadd.f32 %v511, %v1884
    %1886 = vmatprep.mubr.bf16.mxu0 %v223
    %1887 = vmatmul.mubr.bf16.gmra.mxu0 %v222
    %v1888 = vpop.f32.mrf.mxu0
    %v1889 = vadd.f32 %v507, %v1888
    %v1890 = vpop.f32.mrf.mxu0
    %v1891 = vadd.f32 %v511, %v1890
    %v1892 = vpop.f32.mrf.mxu0
    %v1893 = vadd.f32 %v507, %v1892
    %v1894 = vpop.f32.mrf.mxu0
    %v1895 = vadd.f32 %v511, %v1894
    %1896 = vmatprep.mubr.bf16.mxu0 %v231
    %1897 = vmatmul.mubr.bf16.gmra.mxu0 %v230
    %v1898 = vpop.f32.mrf.mxu0
    %v1899 = vadd.f32 %v507, %v1898
    %v1900 = vpop.f32.mrf.mxu0
    %v1901 = vadd.f32 %v511, %v1900
    %v1902 = vpop.f32.mrf.mxu0
    %v1903 = vadd.f32 %v507, %v1902
    %v1904 = vpop.f32.mrf.mxu0
    %v1905 = vadd.f32 %v511, %v1904
    %1906 = vmatprep.mubr.bf16.mxu0 %v239
    %1907 = vmatmul.mubr.bf16.gmra.mxu0 %v238
    %v1908 = vpop.f32.mrf.mxu0
    %v1909 = vadd.f32 %v507, %v1908
    %v1910 = vpop.f32.mrf.mxu0
    %v1911 = vadd.f32 %v511, %v1910
    %v1912 = vpop.f32.mrf.mxu0
    %v1913 = vadd.f32 %v507, %v1912
    %v1914 = vpop.f32.mrf.mxu0
    %v1915 = vadd.f32 %v511, %v1914
    %1916 = vdwg.mxu0
    %1917 = vmatprep.subr.bf16.mxu0 %v1385
    %1918 = vmatpush1.bf16.msra.mxu0 %v1384
    %1919 = vmatprep.subr.bf16.mxu0 %v1381
    %1920 = vmatpush1.bf16.msra.mxu0 %v1380
    %1921 = vmatprep.subr.bf16.mxu0 %v1377
    %1922 = vmatpush1.bf16.msra.mxu0 %v1376
    %1923 = vmatprep.subr.bf16.mxu0 %v1373
    %1924 = vmatpush1.bf16.msra.mxu0 %v1372
    %1925 = vmatprep.subr.bf16.mxu0 %v1369
    %1926 = vmatpush1.bf16.msra.mxu0 %v1368
    %1927 = vmatprep.subr.bf16.mxu0 %v1365
    %1928 = vmatpush1.bf16.msra.mxu0 %v1364
    %1929 = vmatprep.subr.bf16.mxu0 %v1361
    %1930 = vmatpush1.bf16.msra.mxu0 %v1360
    %1931 = vmatprep.subr.bf16.mxu0 %v1357
    %1932 = vmatpush1.bf16.msra.mxu0 %v1356
    %1933 = vmatprep.subr.bf16.mxu0 %v1417
    %1934 = vmatpush2.bf16.msra.mxu0 %v1416
    %1935 = vmatprep.subr.bf16.mxu0 %v1413
    %1936 = vmatpush2.bf16.msra.mxu0 %v1412
    %1937 = vmatprep.subr.bf16.mxu0 %v1409
    %1938 = vmatpush2.bf16.msra.mxu0 %v1408
    %1939 = vmatprep.subr.bf16.mxu0 %v1405
    %1940 = vmatpush2.bf16.msra.mxu0 %v1404
    %1941 = vmatprep.subr.bf16.mxu0 %v1401
    %1942 = vmatpush2.bf16.msra.mxu0 %v1400
    %1943 = vmatprep.subr.bf16.mxu0 %v1397
    %1944 = vmatpush2.bf16.msra.mxu0 %v1396
    %1945 = vmatprep.subr.bf16.mxu0 %v1393
    %1946 = vmatpush2.bf16.msra.mxu0 %v1392
    %1947 = vmatprep.subr.bf16.mxu0 %v1389
    %1948 = vmatpush2.bf16.msra.mxu0 %v1388
    %1949 = vmatprep.mubr.bf16.mxu0 %v185
    %1950 = vmatmul.mubr.bf16.gmra.mxu0 %v184
    %v1951 = vpop.f32.mrf.mxu0
    %v1952 = vadd.f32 %v1839, %v1951
    %v1953 = vpop.f32.mrf.mxu0
    %v1954 = vadd.f32 %v1841, %v1953
    %v1955 = vpop.f32.mrf.mxu0
    %v1956 = vadd.f32 %v1843, %v1955
    %v1957 = vpop.f32.mrf.mxu0
    %v1958 = vadd.f32 %v1845, %v1957
    %1959 = vmatprep.mubr.bf16.mxu0 %v193
    %1960 = vmatmul.mubr.bf16.gmra.mxu0 %v192
    %v1961 = vpop.f32.mrf.mxu0
    %v1962 = vadd.f32 %v1849, %v1961
    %v1963 = vpop.f32.mrf.mxu0
    %v1964 = vadd.f32 %v1851, %v1963
    %v1965 = vpop.f32.mrf.mxu0
    %v1966 = vadd.f32 %v1853, %v1965
    %v1967 = vpop.f32.mrf.mxu0
    %v1968 = vadd.f32 %v1855, %v1967
    %1969 = vmatprep.mubr.bf16.mxu0 %v201
    %1970 = vmatmul.mubr.bf16.gmra.mxu0 %v200
    %v1971 = vpop.f32.mrf.mxu0
    %v1972 = vadd.f32 %v1859, %v1971
    %v1973 = vpop.f32.mrf.mxu0
    %v1974 = vadd.f32 %v1861, %v1973
    %v1975 = vpop.f32.mrf.mxu0
    %v1976 = vadd.f32 %v1863, %v1975
    %v1977 = vpop.f32.mrf.mxu0
    %v1978 = vadd.f32 %v1865, %v1977
    %1979 = vmatprep.mubr.bf16.mxu0 %v209
    %1980 = vmatmul.mubr.bf16.gmra.mxu0 %v208
    %v1981 = vpop.f32.mrf.mxu0
    %v1982 = vadd.f32 %v1869, %v1981
    %v1983 = vpop.f32.mrf.mxu0
    %v1984 = vadd.f32 %v1871, %v1983
    %v1985 = vpop.f32.mrf.mxu0
    %v1986 = vadd.f32 %v1873, %v1985
    %v1987 = vpop.f32.mrf.mxu0
    %v1988 = vadd.f32 %v1875, %v1987
    %1989 = vmatprep.mubr.bf16.mxu0 %v217
    %1990 = vmatmul.mubr.bf16.gmra.mxu0 %v216
    %v1991 = vpop.f32.mrf.mxu0
    %v1992 = vadd.f32 %v1879, %v1991
    %v1993 = vpop.f32.mrf.mxu0
    %v1994 = vadd.f32 %v1881, %v1993
    %v1995 = vpop.f32.mrf.mxu0
    %v1996 = vadd.f32 %v1883, %v1995
    %v1997 = vpop.f32.mrf.mxu0
    %v1998 = vadd.f32 %v1885, %v1997
    %1999 = vmatprep.mubr.bf16.mxu0 %v225
    %2000 = vmatmul.mubr.bf16.gmra.mxu0 %v224
    %v2001 = vpop.f32.mrf.mxu0
    %v2002 = vadd.f32 %v1889, %v2001
    %v2003 = vpop.f32.mrf.mxu0
    %v2004 = vadd.f32 %v1891, %v2003
    %v2005 = vpop.f32.mrf.mxu0
    %v2006 = vadd.f32 %v1893, %v2005
    %v2007 = vpop.f32.mrf.mxu0
    %v2008 = vadd.f32 %v1895, %v2007
    %2009 = vmatprep.mubr.bf16.mxu0 %v233
    %2010 = vmatmul.mubr.bf16.gmra.mxu0 %v232
    %v2011 = vpop.f32.mrf.mxu0
    %v2012 = vadd.f32 %v1899, %v2011
    %v2013 = vpop.f32.mrf.mxu0
    %v2014 = vadd.f32 %v1901, %v2013
    %v2015 = vpop.f32.mrf.mxu0
    %v2016 = vadd.f32 %v1903, %v2015
    %v2017 = vpop.f32.mrf.mxu0
    %v2018 = vadd.f32 %v1905, %v2017
    %2019 = vmatprep.mubr.bf16.mxu0 %v241
    %2020 = vmatmul.mubr.bf16.gmra.mxu0 %v240
    %v2021 = vpop.f32.mrf.mxu0
    %v2022 = vadd.f32 %v1909, %v2021
    %v2023 = vpop.f32.mrf.mxu0
    %v2024 = vadd.f32 %v1911, %v2023
    %v2025 = vpop.f32.mrf.mxu0
    %v2026 = vadd.f32 %v1913, %v2025
    %v2027 = vpop.f32.mrf.mxu0
    %v2028 = vadd.f32 %v1915, %v2027
    %2029 = vdwg.mxu0
    %2030 = vmatprep.subr.bf16.mxu0 %v1449
    %2031 = vmatpush1.bf16.msra.mxu0 %v1448
    %2032 = vmatprep.subr.bf16.mxu0 %v1445
    %2033 = vmatpush1.bf16.msra.mxu0 %v1444
    %2034 = vmatprep.subr.bf16.mxu0 %v1441
    %2035 = vmatpush1.bf16.msra.mxu0 %v1440
    %2036 = vmatprep.subr.bf16.mxu0 %v1437
    %2037 = vmatpush1.bf16.msra.mxu0 %v1436
    %2038 = vmatprep.subr.bf16.mxu0 %v1433
    %2039 = vmatpush1.bf16.msra.mxu0 %v1432
    %2040 = vmatprep.subr.bf16.mxu0 %v1429
    %2041 = vmatpush1.bf16.msra.mxu0 %v1428
    %2042 = vmatprep.subr.bf16.mxu0 %v1425
    %2043 = vmatpush1.bf16.msra.mxu0 %v1424
    %2044 = vmatprep.subr.bf16.mxu0 %v1421
    %2045 = vmatpush1.bf16.msra.mxu0 %v1420
    %2046 = vmatprep.subr.bf16.mxu0 %v1481
    %2047 = vmatpush2.bf16.msra.mxu0 %v1480
    %2048 = vmatprep.subr.bf16.mxu0 %v1477
    %2049 = vmatpush2.bf16.msra.mxu0 %v1476
    %2050 = vmatprep.subr.bf16.mxu0 %v1473
    %2051 = vmatpush2.bf16.msra.mxu0 %v1472
    %2052 = vmatprep.subr.bf16.mxu0 %v1469
    %2053 = vmatpush2.bf16.msra.mxu0 %v1468
    %2054 = vmatprep.subr.bf16.mxu0 %v1465
    %2055 = vmatpush2.bf16.msra.mxu0 %v1464
    %2056 = vmatprep.subr.bf16.mxu0 %v1461
    %2057 = vmatpush2.bf16.msra.mxu0 %v1460
    %2058 = vmatprep.subr.bf16.mxu0 %v1457
    %2059 = vmatpush2.bf16.msra.mxu0 %v1456
    %2060 = vmatprep.subr.bf16.mxu0 %v1453
    %2061 = vmatpush2.bf16.msra.mxu0 %v1452
    %2062 = vmatprep.mubr.bf16.mxu0 %v187
    %2063 = vmatmul.mubr.bf16.gmra.mxu0 %v186
    %v2064 = vpop.f32.mrf.mxu0
    %v2065 = vadd.f32 %v1952, %v2064
    %v2066 = vpop.f32.mrf.mxu0
    %v2067 = vadd.f32 %v1954, %v2066
    %v2068 = vpop.f32.mrf.mxu0
    %v2069 = vadd.f32 %v1956, %v2068
    %v2070 = vpop.f32.mrf.mxu0
    %v2071 = vadd.f32 %v1958, %v2070
    %2072 = vmatprep.mubr.bf16.mxu0 %v195
    %2073 = vmatmul.mubr.bf16.gmra.mxu0 %v194
    %v2074 = vpop.f32.mrf.mxu0
    %v2075 = vadd.f32 %v1962, %v2074
    %v2076 = vpop.f32.mrf.mxu0
    %v2077 = vadd.f32 %v1964, %v2076
    %v2078 = vpop.f32.mrf.mxu0
    %v2079 = vadd.f32 %v1966, %v2078
    %v2080 = vpop.f32.mrf.mxu0
    %v2081 = vadd.f32 %v1968, %v2080
    %2082 = vmatprep.mubr.bf16.mxu0 %v203
    %2083 = vmatmul.mubr.bf16.gmra.mxu0 %v202
    %v2084 = vpop.f32.mrf.mxu0
    %v2085 = vadd.f32 %v1972, %v2084
    %v2086 = vpop.f32.mrf.mxu0
    %v2087 = vadd.f32 %v1974, %v2086
    %v2088 = vpop.f32.mrf.mxu0
    %v2089 = vadd.f32 %v1976, %v2088
    %v2090 = vpop.f32.mrf.mxu0
    %v2091 = vadd.f32 %v1978, %v2090
    %2092 = vmatprep.mubr.bf16.mxu0 %v211
    %2093 = vmatmul.mubr.bf16.gmra.mxu0 %v210
    %v2094 = vpop.f32.mrf.mxu0
    %v2095 = vadd.f32 %v1982, %v2094
    %v2096 = vpop.f32.mrf.mxu0
    %v2097 = vadd.f32 %v1984, %v2096
    %v2098 = vpop.f32.mrf.mxu0
    %v2099 = vadd.f32 %v1986, %v2098
    %v2100 = vpop.f32.mrf.mxu0
    %v2101 = vadd.f32 %v1988, %v2100
    %2102 = vmatprep.mubr.bf16.mxu0 %v219
    %2103 = vmatmul.mubr.bf16.gmra.mxu0 %v218
    %v2104 = vpop.f32.mrf.mxu0
    %v2105 = vadd.f32 %v1992, %v2104
    %v2106 = vpop.f32.mrf.mxu0
    %v2107 = vadd.f32 %v1994, %v2106
    %v2108 = vpop.f32.mrf.mxu0
    %v2109 = vadd.f32 %v1996, %v2108
    %v2110 = vpop.f32.mrf.mxu0
    %v2111 = vadd.f32 %v1998, %v2110
    %2112 = vmatprep.mubr.bf16.mxu0 %v227
    %2113 = vmatmul.mubr.bf16.gmra.mxu0 %v226
    %v2114 = vpop.f32.mrf.mxu0
    %v2115 = vadd.f32 %v2002, %v2114
    %v2116 = vpop.f32.mrf.mxu0
    %v2117 = vadd.f32 %v2004, %v2116
    %v2118 = vpop.f32.mrf.mxu0
    %v2119 = vadd.f32 %v2006, %v2118
    %v2120 = vpop.f32.mrf.mxu0
    %v2121 = vadd.f32 %v2008, %v2120
    %2122 = vmatprep.mubr.bf16.mxu0 %v235
    %2123 = vmatmul.mubr.bf16.gmra.mxu0 %v234
    %v2124 = vpop.f32.mrf.mxu0
    %v2125 = vadd.f32 %v2012, %v2124
    %v2126 = vpop.f32.mrf.mxu0
    %v2127 = vadd.f32 %v2014, %v2126
    %v2128 = vpop.f32.mrf.mxu0
    %v2129 = vadd.f32 %v2016, %v2128
    %v2130 = vpop.f32.mrf.mxu0
    %v2131 = vadd.f32 %v2018, %v2130
    %2132 = vmatprep.mubr.bf16.mxu0 %v243
    %2133 = vmatmul.mubr.bf16.gmra.mxu0 %v242
    %v2134 = vpop.f32.mrf.mxu0
    %v2135 = vadd.f32 %v2022, %v2134
    %v2136 = vpop.f32.mrf.mxu0
    %v2137 = vadd.f32 %v2024, %v2136
    %v2138 = vpop.f32.mrf.mxu0
    %v2139 = vadd.f32 %v2026, %v2138
    %v2140 = vpop.f32.mrf.mxu0
    %v2141 = vadd.f32 %v2028, %v2140
    %2142 = vdwg.mxu0
    %2143 = vmatprep.subr.bf16.mxu0 %v1513
    %2144 = vmatpush1.bf16.msra.mxu0 %v1512
    %2145 = vmatprep.subr.bf16.mxu0 %v1509
    %2146 = vmatpush1.bf16.msra.mxu0 %v1508
    %2147 = vmatprep.subr.bf16.mxu0 %v1505
    %2148 = vmatpush1.bf16.msra.mxu0 %v1504
    %2149 = vmatprep.subr.bf16.mxu0 %v1501
    %2150 = vmatpush1.bf16.msra.mxu0 %v1500
    %2151 = vmatprep.subr.bf16.mxu0 %v1497
    %2152 = vmatpush1.bf16.msra.mxu0 %v1496
    %2153 = vmatprep.subr.bf16.mxu0 %v1493
    %2154 = vmatpush1.bf16.msra.mxu0 %v1492
    %2155 = vmatprep.subr.bf16.mxu0 %v1489
    %2156 = vmatpush1.bf16.msra.mxu0 %v1488
    %2157 = vmatprep.subr.bf16.mxu0 %v1485
    %2158 = vmatpush1.bf16.msra.mxu0 %v1484
    %2159 = vmatprep.subr.bf16.mxu0 %v1545
    %2160 = vmatpush2.bf16.msra.mxu0 %v1544
    %2161 = vmatprep.subr.bf16.mxu0 %v1541
    %2162 = vmatpush2.bf16.msra.mxu0 %v1540
    %2163 = vmatprep.subr.bf16.mxu0 %v1537
    %2164 = vmatpush2.bf16.msra.mxu0 %v1536
    %2165 = vmatprep.subr.bf16.mxu0 %v1533
    %2166 = vmatpush2.bf16.msra.mxu0 %v1532
    %2167 = vmatprep.subr.bf16.mxu0 %v1529
    %2168 = vmatpush2.bf16.msra.mxu0 %v1528
    %2169 = vmatprep.subr.bf16.mxu0 %v1525
    %2170 = vmatpush2.bf16.msra.mxu0 %v1524
    %2171 = vmatprep.subr.bf16.mxu0 %v1521
    %2172 = vmatpush2.bf16.msra.mxu0 %v1520
    %2173 = vmatprep.subr.bf16.mxu0 %v1517
    %2174 = vmatpush2.bf16.msra.mxu0 %v1516
    %2175 = vmatprep.mubr.bf16.mxu0 %v189
    %2176 = vmatmul.mubr.bf16.gmra.mxu0 %v188
    %v2177 = vpop.f32.mrf.mxu0
    %v2178 = vadd.f32 %v2065, %v2177
    %v2179 = vpop.f32.mrf.mxu0
    %v2180 = vadd.f32 %v2067, %v2179
    %v2181 = vpop.f32.mrf.mxu0
    %v2182 = vadd.f32 %v2069, %v2181
    %v2183 = vpop.f32.mrf.mxu0
    %v2184 = vadd.f32 %v2071, %v2183
    %2185 = vmatprep.mubr.bf16.mxu0 %v197
    %2186 = vmatmul.mubr.bf16.gmra.mxu0 %v196
    %v2187 = vpop.f32.mrf.mxu0
    %v2188 = vadd.f32 %v2075, %v2187
    %v2189 = vpop.f32.mrf.mxu0
    %v2190 = vadd.f32 %v2077, %v2189
    %v2191 = vpop.f32.mrf.mxu0
    %v2192 = vadd.f32 %v2079, %v2191
    %v2193 = vpop.f32.mrf.mxu0
    %v2194 = vadd.f32 %v2081, %v2193
    %2195 = vmatprep.mubr.bf16.mxu0 %v205
    %2196 = vmatmul.mubr.bf16.gmra.mxu0 %v204
    %v2197 = vpop.f32.mrf.mxu0
    %v2198 = vadd.f32 %v2085, %v2197
    %v2199 = vpop.f32.mrf.mxu0
    %v2200 = vadd.f32 %v2087, %v2199
    %v2201 = vpop.f32.mrf.mxu0
    %v2202 = vadd.f32 %v2089, %v2201
    %v2203 = vpop.f32.mrf.mxu0
    %v2204 = vadd.f32 %v2091, %v2203
    %2205 = vmatprep.mubr.bf16.mxu0 %v213
    %2206 = vmatmul.mubr.bf16.gmra.mxu0 %v212
    %v2207 = vpop.f32.mrf.mxu0
    %v2208 = vadd.f32 %v2095, %v2207
    %v2209 = vpop.f32.mrf.mxu0
    %v2210 = vadd.f32 %v2097, %v2209
    %v2211 = vpop.f32.mrf.mxu0
    %v2212 = vadd.f32 %v2099, %v2211
    %v2213 = vpop.f32.mrf.mxu0
    %v2214 = vadd.f32 %v2101, %v2213
    %2215 = vmatprep.mubr.bf16.mxu0 %v221
    %2216 = vmatmul.mubr.bf16.gmra.mxu0 %v220
    %v2217 = vpop.f32.mrf.mxu0
    %v2218 = vadd.f32 %v2105, %v2217
    %v2219 = vpop.f32.mrf.mxu0
    %v2220 = vadd.f32 %v2107, %v2219
    %v2221 = vpop.f32.mrf.mxu0
    %v2222 = vadd.f32 %v2109, %v2221
    %v2223 = vpop.f32.mrf.mxu0
    %v2224 = vadd.f32 %v2111, %v2223
    %2225 = vmatprep.mubr.bf16.mxu0 %v229
    %2226 = vmatmul.mubr.bf16.gmra.mxu0 %v228
    %v2227 = vpop.f32.mrf.mxu0
    %v2228 = vadd.f32 %v2115, %v2227
    %v2229 = vpop.f32.mrf.mxu0
    %v2230 = vadd.f32 %v2117, %v2229
    %v2231 = vpop.f32.mrf.mxu0
    %v2232 = vadd.f32 %v2119, %v2231
    %v2233 = vpop.f32.mrf.mxu0
    %v2234 = vadd.f32 %v2121, %v2233
    %2235 = vmatprep.mubr.bf16.mxu0 %v237
    %2236 = vmatmul.mubr.bf16.gmra.mxu0 %v236
    %v2237 = vpop.f32.mrf.mxu0
    %v2238 = vadd.f32 %v2125, %v2237
    %v2239 = vpop.f32.mrf.mxu0
    %v2240 = vadd.f32 %v2127, %v2239
    %v2241 = vpop.f32.mrf.mxu0
    %v2242 = vadd.f32 %v2129, %v2241
    %v2243 = vpop.f32.mrf.mxu0
    %v2244 = vadd.f32 %v2131, %v2243
    %2245 = vmatprep.mubr.bf16.mxu0 %v245
    %2246 = vmatmul.mubr.bf16.gmra.mxu0 %v244
    %v2247 = vpop.f32.mrf.mxu0
    %v2248 = vadd.f32 %v2135, %v2247
    %v2249 = vpop.f32.mrf.mxu0
    %v2250 = vadd.f32 %v2137, %v2249
    %v2251 = vpop.f32.mrf.mxu0
    %v2252 = vadd.f32 %v2139, %v2251
    %v2253 = vpop.f32.mrf.mxu0
    %v2254 = vadd.f32 %v2141, %v2253
    %2255 = vdwg.mxu0
    %2256 = vmatprep.subr.bf16.mxu0 %v1323
    %2257 = vmatpush1.bf16.msra.mxu0 %v1322
    %2258 = vmatprep.subr.bf16.mxu0 %v1319
    %2259 = vmatpush1.bf16.msra.mxu0 %v1318
    %2260 = vmatprep.subr.bf16.mxu0 %v1315
    %2261 = vmatpush1.bf16.msra.mxu0 %v1314
    %2262 = vmatprep.subr.bf16.mxu0 %v1311
    %2263 = vmatpush1.bf16.msra.mxu0 %v1310
    %2264 = vmatprep.subr.bf16.mxu0 %v1307
    %2265 = vmatpush1.bf16.msra.mxu0 %v1306
    %2266 = vmatprep.subr.bf16.mxu0 %v1303
    %2267 = vmatpush1.bf16.msra.mxu0 %v1302
    %2268 = vmatprep.subr.bf16.mxu0 %v1299
    %2269 = vmatpush1.bf16.msra.mxu0 %v1298
    %2270 = vmatprep.subr.bf16.mxu0 %v1295
    %2271 = vmatpush1.bf16.msra.mxu0 %v1294
    %2272 = vmatprep.subr.bf16.mxu0 %v1355
    %2273 = vmatpush2.bf16.msra.mxu0 %v1354
    %2274 = vmatprep.subr.bf16.mxu0 %v1351
    %2275 = vmatpush2.bf16.msra.mxu0 %v1350
    %2276 = vmatprep.subr.bf16.mxu0 %v1347
    %2277 = vmatpush2.bf16.msra.mxu0 %v1346
    %2278 = vmatprep.subr.bf16.mxu0 %v1343
    %2279 = vmatpush2.bf16.msra.mxu0 %v1342
    %2280 = vmatprep.subr.bf16.mxu0 %v1339
    %2281 = vmatpush2.bf16.msra.mxu0 %v1338
    %2282 = vmatprep.subr.bf16.mxu0 %v1335
    %2283 = vmatpush2.bf16.msra.mxu0 %v1334
    %2284 = vmatprep.subr.bf16.mxu0 %v1331
    %2285 = vmatpush2.bf16.msra.mxu0 %v1330
    %2286 = vmatprep.subr.bf16.mxu0 %v1327
    %2287 = vmatpush2.bf16.msra.mxu0 %v1326
    %2288 = vmatprep.mubr.bf16.mxu0 %v183
    %2289 = vmatmul.mubr.bf16.gmra.mxu0 %v182
    %v2290 = vpop.f32.mrf.mxu0
    %v2291 = vadd.f32 %v515, %v2290
    %v2292 = vpop.f32.mrf.mxu0
    %v2293 = vadd.f32 %v519, %v2292
    %v2294 = vpop.f32.mrf.mxu0
    %v2295 = vadd.f32 %v515, %v2294
    %v2296 = vpop.f32.mrf.mxu0
    %v2297 = vadd.f32 %v519, %v2296
    %2298 = vmatprep.mubr.bf16.mxu0 %v191
    %2299 = vmatmul.mubr.bf16.gmra.mxu0 %v190
    %v2300 = vpop.f32.mrf.mxu0
    %v2301 = vadd.f32 %v515, %v2300
    %v2302 = vpop.f32.mrf.mxu0
    %v2303 = vadd.f32 %v519, %v2302
    %v2304 = vpop.f32.mrf.mxu0
    %v2305 = vadd.f32 %v515, %v2304
    %v2306 = vpop.f32.mrf.mxu0
    %v2307 = vadd.f32 %v519, %v2306
    %2308 = vmatprep.mubr.bf16.mxu0 %v199
    %2309 = vmatmul.mubr.bf16.gmra.mxu0 %v198
    %v2310 = vpop.f32.mrf.mxu0
    %v2311 = vadd.f32 %v515, %v2310
    %v2312 = vpop.f32.mrf.mxu0
    %v2313 = vadd.f32 %v519, %v2312
    %v2314 = vpop.f32.mrf.mxu0
    %v2315 = vadd.f32 %v515, %v2314
    %v2316 = vpop.f32.mrf.mxu0
    %v2317 = vadd.f32 %v519, %v2316
    %2318 = vmatprep.mubr.bf16.mxu0 %v207
    %2319 = vmatmul.mubr.bf16.gmra.mxu0 %v206
    %v2320 = vpop.f32.mrf.mxu0
    %v2321 = vadd.f32 %v515, %v2320
    %v2322 = vpop.f32.mrf.mxu0
    %v2323 = vadd.f32 %v519, %v2322
    %v2324 = vpop.f32.mrf.mxu0
    %v2325 = vadd.f32 %v515, %v2324
    %v2326 = vpop.f32.mrf.mxu0
    %v2327 = vadd.f32 %v519, %v2326
    %2328 = vmatprep.mubr.bf16.mxu0 %v215
    %2329 = vmatmul.mubr.bf16.gmra.mxu0 %v214
    %v2330 = vpop.f32.mrf.mxu0
    %v2331 = vadd.f32 %v515, %v2330
    %v2332 = vpop.f32.mrf.mxu0
    %v2333 = vadd.f32 %v519, %v2332
    %v2334 = vpop.f32.mrf.mxu0
    %v2335 = vadd.f32 %v515, %v2334
    %v2336 = vpop.f32.mrf.mxu0
    %v2337 = vadd.f32 %v519, %v2336
    %2338 = vmatprep.mubr.bf16.mxu0 %v223
    %2339 = vmatmul.mubr.bf16.gmra.mxu0 %v222
    %v2340 = vpop.f32.mrf.mxu0
    %v2341 = vadd.f32 %v515, %v2340
    %v2342 = vpop.f32.mrf.mxu0
    %v2343 = vadd.f32 %v519, %v2342
    %v2344 = vpop.f32.mrf.mxu0
    %v2345 = vadd.f32 %v515, %v2344
    %v2346 = vpop.f32.mrf.mxu0
    %v2347 = vadd.f32 %v519, %v2346
    %2348 = vmatprep.mubr.bf16.mxu0 %v231
    %2349 = vmatmul.mubr.bf16.gmra.mxu0 %v230
    %v2350 = vpop.f32.mrf.mxu0
    %v2351 = vadd.f32 %v515, %v2350
    %v2352 = vpop.f32.mrf.mxu0
    %v2353 = vadd.f32 %v519, %v2352
    %v2354 = vpop.f32.mrf.mxu0
    %v2355 = vadd.f32 %v515, %v2354
    %v2356 = vpop.f32.mrf.mxu0
    %v2357 = vadd.f32 %v519, %v2356
    %2358 = vmatprep.mubr.bf16.mxu0 %v239
    %2359 = vmatmul.mubr.bf16.gmra.mxu0 %v238
    %v2360 = vpop.f32.mrf.mxu0
    %v2361 = vadd.f32 %v515, %v2360
    %v2362 = vpop.f32.mrf.mxu0
    %v2363 = vadd.f32 %v519, %v2362
    %v2364 = vpop.f32.mrf.mxu0
    %v2365 = vadd.f32 %v515, %v2364
    %v2366 = vpop.f32.mrf.mxu0
    %v2367 = vadd.f32 %v519, %v2366
    %2368 = vdwg.mxu0
    %2369 = vmatprep.subr.bf16.mxu0 %v1387
    %2370 = vmatpush1.bf16.msra.mxu0 %v1386
    %2371 = vmatprep.subr.bf16.mxu0 %v1383
    %2372 = vmatpush1.bf16.msra.mxu0 %v1382
    %2373 = vmatprep.subr.bf16.mxu0 %v1379
    %2374 = vmatpush1.bf16.msra.mxu0 %v1378
    %2375 = vmatprep.subr.bf16.mxu0 %v1375
    %2376 = vmatpush1.bf16.msra.mxu0 %v1374
    %2377 = vmatprep.subr.bf16.mxu0 %v1371
    %2378 = vmatpush1.bf16.msra.mxu0 %v1370
    %2379 = vmatprep.subr.bf16.mxu0 %v1367
    %2380 = vmatpush1.bf16.msra.mxu0 %v1366
    %2381 = vmatprep.subr.bf16.mxu0 %v1363
    %2382 = vmatpush1.bf16.msra.mxu0 %v1362
    %2383 = vmatprep.subr.bf16.mxu0 %v1359
    %2384 = vmatpush1.bf16.msra.mxu0 %v1358
    %2385 = vmatprep.subr.bf16.mxu0 %v1419
    %2386 = vmatpush2.bf16.msra.mxu0 %v1418
    %2387 = vmatprep.subr.bf16.mxu0 %v1415
    %2388 = vmatpush2.bf16.msra.mxu0 %v1414
    %2389 = vmatprep.subr.bf16.mxu0 %v1411
    %2390 = vmatpush2.bf16.msra.mxu0 %v1410
    %2391 = vmatprep.subr.bf16.mxu0 %v1407
    %2392 = vmatpush2.bf16.msra.mxu0 %v1406
    %2393 = vmatprep.subr.bf16.mxu0 %v1403
    %2394 = vmatpush2.bf16.msra.mxu0 %v1402
    %2395 = vmatprep.subr.bf16.mxu0 %v1399
    %2396 = vmatpush2.bf16.msra.mxu0 %v1398
    %2397 = vmatprep.subr.bf16.mxu0 %v1395
    %2398 = vmatpush2.bf16.msra.mxu0 %v1394
    %2399 = vmatprep.subr.bf16.mxu0 %v1391
    %2400 = vmatpush2.bf16.msra.mxu0 %v1390
    %2401 = vmatprep.mubr.bf16.mxu0 %v185
    %2402 = vmatmul.mubr.bf16.gmra.mxu0 %v184
    %v2403 = vpop.f32.mrf.mxu0
    %v2404 = vadd.f32 %v2291, %v2403
    %v2405 = vpop.f32.mrf.mxu0
    %v2406 = vadd.f32 %v2293, %v2405
    %v2407 = vpop.f32.mrf.mxu0
    %v2408 = vadd.f32 %v2295, %v2407
    %v2409 = vpop.f32.mrf.mxu0
    %v2410 = vadd.f32 %v2297, %v2409
    %2411 = vmatprep.mubr.bf16.mxu0 %v193
    %2412 = vmatmul.mubr.bf16.gmra.mxu0 %v192
    %v2413 = vpop.f32.mrf.mxu0
    %v2414 = vadd.f32 %v2301, %v2413
    %v2415 = vpop.f32.mrf.mxu0
    %v2416 = vadd.f32 %v2303, %v2415
    %v2417 = vpop.f32.mrf.mxu0
    %v2418 = vadd.f32 %v2305, %v2417
    %v2419 = vpop.f32.mrf.mxu0
    %v2420 = vadd.f32 %v2307, %v2419
    %2421 = vmatprep.mubr.bf16.mxu0 %v201
    %2422 = vmatmul.mubr.bf16.gmra.mxu0 %v200
    %v2423 = vpop.f32.mrf.mxu0
    %v2424 = vadd.f32 %v2311, %v2423
    %v2425 = vpop.f32.mrf.mxu0
    %v2426 = vadd.f32 %v2313, %v2425
    %v2427 = vpop.f32.mrf.mxu0
    %v2428 = vadd.f32 %v2315, %v2427
    %v2429 = vpop.f32.mrf.mxu0
    %v2430 = vadd.f32 %v2317, %v2429
    %2431 = vmatprep.mubr.bf16.mxu0 %v209
    %2432 = vmatmul.mubr.bf16.gmra.mxu0 %v208
    %v2433 = vpop.f32.mrf.mxu0
    %v2434 = vadd.f32 %v2321, %v2433
    %v2435 = vpop.f32.mrf.mxu0
    %v2436 = vadd.f32 %v2323, %v2435
    %v2437 = vpop.f32.mrf.mxu0
    %v2438 = vadd.f32 %v2325, %v2437
    %v2439 = vpop.f32.mrf.mxu0
    %v2440 = vadd.f32 %v2327, %v2439
    %2441 = vmatprep.mubr.bf16.mxu0 %v217
    %2442 = vmatmul.mubr.bf16.gmra.mxu0 %v216
    %v2443 = vpop.f32.mrf.mxu0
    %v2444 = vadd.f32 %v2331, %v2443
    %v2445 = vpop.f32.mrf.mxu0
    %v2446 = vadd.f32 %v2333, %v2445
    %v2447 = vpop.f32.mrf.mxu0
    %v2448 = vadd.f32 %v2335, %v2447
    %v2449 = vpop.f32.mrf.mxu0
    %v2450 = vadd.f32 %v2337, %v2449
    %2451 = vmatprep.mubr.bf16.mxu0 %v225
    %2452 = vmatmul.mubr.bf16.gmra.mxu0 %v224
    %v2453 = vpop.f32.mrf.mxu0
    %v2454 = vadd.f32 %v2341, %v2453
    %v2455 = vpop.f32.mrf.mxu0
    %v2456 = vadd.f32 %v2343, %v2455
    %v2457 = vpop.f32.mrf.mxu0
    %v2458 = vadd.f32 %v2345, %v2457
    %v2459 = vpop.f32.mrf.mxu0
    %v2460 = vadd.f32 %v2347, %v2459
    %2461 = vmatprep.mubr.bf16.mxu0 %v233
    %2462 = vmatmul.mubr.bf16.gmra.mxu0 %v232
    %v2463 = vpop.f32.mrf.mxu0
    %v2464 = vadd.f32 %v2351, %v2463
    %v2465 = vpop.f32.mrf.mxu0
    %v2466 = vadd.f32 %v2353, %v2465
    %v2467 = vpop.f32.mrf.mxu0
    %v2468 = vadd.f32 %v2355, %v2467
    %v2469 = vpop.f32.mrf.mxu0
    %v2470 = vadd.f32 %v2357, %v2469
    %2471 = vmatprep.mubr.bf16.mxu0 %v241
    %2472 = vmatmul.mubr.bf16.gmra.mxu0 %v240
    %v2473 = vpop.f32.mrf.mxu0
    %v2474 = vadd.f32 %v2361, %v2473
    %v2475 = vpop.f32.mrf.mxu0
    %v2476 = vadd.f32 %v2363, %v2475
    %v2477 = vpop.f32.mrf.mxu0
    %v2478 = vadd.f32 %v2365, %v2477
    %v2479 = vpop.f32.mrf.mxu0
    %v2480 = vadd.f32 %v2367, %v2479
    %2481 = vdwg.mxu0
    %2482 = vmatprep.subr.bf16.mxu0 %v1451
    %2483 = vmatpush1.bf16.msra.mxu0 %v1450
    %2484 = vmatprep.subr.bf16.mxu0 %v1447
    %2485 = vmatpush1.bf16.msra.mxu0 %v1446
    %2486 = vmatprep.subr.bf16.mxu0 %v1443
    %2487 = vmatpush1.bf16.msra.mxu0 %v1442
    %2488 = vmatprep.subr.bf16.mxu0 %v1439
    %2489 = vmatpush1.bf16.msra.mxu0 %v1438
    %2490 = vmatprep.subr.bf16.mxu0 %v1435
    %2491 = vmatpush1.bf16.msra.mxu0 %v1434
    %2492 = vmatprep.subr.bf16.mxu0 %v1431
    %2493 = vmatpush1.bf16.msra.mxu0 %v1430
    %2494 = vmatprep.subr.bf16.mxu0 %v1427
    %2495 = vmatpush1.bf16.msra.mxu0 %v1426
    %2496 = vmatprep.subr.bf16.mxu0 %v1423
    %2497 = vmatpush1.bf16.msra.mxu0 %v1422
    %2498 = vmatprep.subr.bf16.mxu0 %v1483
    %2499 = vmatpush2.bf16.msra.mxu0 %v1482
    %2500 = vmatprep.subr.bf16.mxu0 %v1479
    %2501 = vmatpush2.bf16.msra.mxu0 %v1478
    %2502 = vmatprep.subr.bf16.mxu0 %v1475
    %2503 = vmatpush2.bf16.msra.mxu0 %v1474
    %2504 = vmatprep.subr.bf16.mxu0 %v1471
    %2505 = vmatpush2.bf16.msra.mxu0 %v1470
    %2506 = vmatprep.subr.bf16.mxu0 %v1467
    %2507 = vmatpush2.bf16.msra.mxu0 %v1466
    %2508 = vmatprep.subr.bf16.mxu0 %v1463
    %2509 = vmatpush2.bf16.msra.mxu0 %v1462
    %2510 = vmatprep.subr.bf16.mxu0 %v1459
    %2511 = vmatpush2.bf16.msra.mxu0 %v1458
    %2512 = vmatprep.subr.bf16.mxu0 %v1455
    %2513 = vmatpush2.bf16.msra.mxu0 %v1454
    %2514 = vmatprep.mubr.bf16.mxu0 %v187
    %2515 = vmatmul.mubr.bf16.gmra.mxu0 %v186
    %v2516 = vpop.f32.mrf.mxu0
    %v2517 = vadd.f32 %v2404, %v2516
    %v2518 = vpop.f32.mrf.mxu0
    %v2519 = vadd.f32 %v2406, %v2518
    %v2520 = vpop.f32.mrf.mxu0
    %v2521 = vadd.f32 %v2408, %v2520
    %v2522 = vpop.f32.mrf.mxu0
    %v2523 = vadd.f32 %v2410, %v2522
    %2524 = vmatprep.mubr.bf16.mxu0 %v195
    %2525 = vmatmul.mubr.bf16.gmra.mxu0 %v194
    %v2526 = vpop.f32.mrf.mxu0
    %v2527 = vadd.f32 %v2414, %v2526
    %v2528 = vpop.f32.mrf.mxu0
    %v2529 = vadd.f32 %v2416, %v2528
    %v2530 = vpop.f32.mrf.mxu0
    %v2531 = vadd.f32 %v2418, %v2530
    %v2532 = vpop.f32.mrf.mxu0
    %v2533 = vadd.f32 %v2420, %v2532
    %2534 = vmatprep.mubr.bf16.mxu0 %v203
    %2535 = vmatmul.mubr.bf16.gmra.mxu0 %v202
    %v2536 = vpop.f32.mrf.mxu0
    %v2537 = vadd.f32 %v2424, %v2536
    %v2538 = vpop.f32.mrf.mxu0
    %v2539 = vadd.f32 %v2426, %v2538
    %v2540 = vpop.f32.mrf.mxu0
    %v2541 = vadd.f32 %v2428, %v2540
    %v2542 = vpop.f32.mrf.mxu0
    %v2543 = vadd.f32 %v2430, %v2542
    %2544 = vmatprep.mubr.bf16.mxu0 %v211
    %2545 = vmatmul.mubr.bf16.gmra.mxu0 %v210
    %v2546 = vpop.f32.mrf.mxu0
    %v2547 = vadd.f32 %v2434, %v2546
    %v2548 = vpop.f32.mrf.mxu0
    %v2549 = vadd.f32 %v2436, %v2548
    %v2550 = vpop.f32.mrf.mxu0
    %v2551 = vadd.f32 %v2438, %v2550
    %v2552 = vpop.f32.mrf.mxu0
    %v2553 = vadd.f32 %v2440, %v2552
    %2554 = vmatprep.mubr.bf16.mxu0 %v219
    %2555 = vmatmul.mubr.bf16.gmra.mxu0 %v218
    %v2556 = vpop.f32.mrf.mxu0
    %v2557 = vadd.f32 %v2444, %v2556
    %v2558 = vpop.f32.mrf.mxu0
    %v2559 = vadd.f32 %v2446, %v2558
    %v2560 = vpop.f32.mrf.mxu0
    %v2561 = vadd.f32 %v2448, %v2560
    %v2562 = vpop.f32.mrf.mxu0
    %v2563 = vadd.f32 %v2450, %v2562
    %2564 = vmatprep.mubr.bf16.mxu0 %v227
    %2565 = vmatmul.mubr.bf16.gmra.mxu0 %v226
    %v2566 = vpop.f32.mrf.mxu0
    %v2567 = vadd.f32 %v2454, %v2566
    %v2568 = vpop.f32.mrf.mxu0
    %v2569 = vadd.f32 %v2456, %v2568
    %v2570 = vpop.f32.mrf.mxu0
    %v2571 = vadd.f32 %v2458, %v2570
    %v2572 = vpop.f32.mrf.mxu0
    %v2573 = vadd.f32 %v2460, %v2572
    %2574 = vmatprep.mubr.bf16.mxu0 %v235
    %2575 = vmatmul.mubr.bf16.gmra.mxu0 %v234
    %v2576 = vpop.f32.mrf.mxu0
    %v2577 = vadd.f32 %v2464, %v2576
    %v2578 = vpop.f32.mrf.mxu0
    %v2579 = vadd.f32 %v2466, %v2578
    %v2580 = vpop.f32.mrf.mxu0
    %v2581 = vadd.f32 %v2468, %v2580
    %v2582 = vpop.f32.mrf.mxu0
    %v2583 = vadd.f32 %v2470, %v2582
    %2584 = vmatprep.mubr.bf16.mxu0 %v243
    %2585 = vmatmul.mubr.bf16.gmra.mxu0 %v242
    %v2586 = vpop.f32.mrf.mxu0
    %v2587 = vadd.f32 %v2474, %v2586
    %v2588 = vpop.f32.mrf.mxu0
    %v2589 = vadd.f32 %v2476, %v2588
    %v2590 = vpop.f32.mrf.mxu0
    %v2591 = vadd.f32 %v2478, %v2590
    %v2592 = vpop.f32.mrf.mxu0
    %v2593 = vadd.f32 %v2480, %v2592
    %2594 = vdwg.mxu0
    %2595 = vmatprep.subr.bf16.mxu0 %v1515
    %2596 = vmatpush1.bf16.msra.mxu0 %v1514
    %2597 = vmatprep.subr.bf16.mxu0 %v1511
    %2598 = vmatpush1.bf16.msra.mxu0 %v1510
    %2599 = vmatprep.subr.bf16.mxu0 %v1507
    %2600 = vmatpush1.bf16.msra.mxu0 %v1506
    %2601 = vmatprep.subr.bf16.mxu0 %v1503
    %2602 = vmatpush1.bf16.msra.mxu0 %v1502
    %2603 = vmatprep.subr.bf16.mxu0 %v1499
    %2604 = vmatpush1.bf16.msra.mxu0 %v1498
    %2605 = vmatprep.subr.bf16.mxu0 %v1495
    %2606 = vmatpush1.bf16.msra.mxu0 %v1494
    %2607 = vmatprep.subr.bf16.mxu0 %v1491
    %2608 = vmatpush1.bf16.msra.mxu0 %v1490
    %2609 = vmatprep.subr.bf16.mxu0 %v1487
    %2610 = vmatpush1.bf16.msra.mxu0 %v1486
    %2611 = vmatprep.subr.bf16.mxu0 %v1547
    %2612 = vmatpush2.bf16.msra.mxu0 %v1546
    %2613 = vmatprep.subr.bf16.mxu0 %v1543
    %2614 = vmatpush2.bf16.msra.mxu0 %v1542
    %2615 = vmatprep.subr.bf16.mxu0 %v1539
    %2616 = vmatpush2.bf16.msra.mxu0 %v1538
    %2617 = vmatprep.subr.bf16.mxu0 %v1535
    %2618 = vmatpush2.bf16.msra.mxu0 %v1534
    %2619 = vmatprep.subr.bf16.mxu0 %v1531
    %2620 = vmatpush2.bf16.msra.mxu0 %v1530
    %2621 = vmatprep.subr.bf16.mxu0 %v1527
    %2622 = vmatpush2.bf16.msra.mxu0 %v1526
    %2623 = vmatprep.subr.bf16.mxu0 %v1523
    %2624 = vmatpush2.bf16.msra.mxu0 %v1522
    %2625 = vmatprep.subr.bf16.mxu0 %v1519
    %2626 = vmatpush2.bf16.msra.mxu0 %v1518
    %2627 = vmatprep.mubr.bf16.mxu0 %v189
    %2628 = vmatmul.mubr.bf16.gmra.mxu0 %v188
    %v2629 = vpop.f32.mrf.mxu0
    %v2630 = vadd.f32 %v2517, %v2629
    %v2631 = vpop.f32.mrf.mxu0
    %v2632 = vadd.f32 %v2519, %v2631
    %v2633 = vpop.f32.mrf.mxu0
    %v2634 = vadd.f32 %v2521, %v2633
    %v2635 = vpop.f32.mrf.mxu0
    %v2636 = vadd.f32 %v2523, %v2635
    %2637 = vmatprep.mubr.bf16.mxu0 %v197
    %2638 = vmatmul.mubr.bf16.gmra.mxu0 %v196
    %v2639 = vpop.f32.mrf.mxu0
    %v2640 = vadd.f32 %v2527, %v2639
    %v2641 = vpop.f32.mrf.mxu0
    %v2642 = vadd.f32 %v2529, %v2641
    %v2643 = vpop.f32.mrf.mxu0
    %v2644 = vadd.f32 %v2531, %v2643
    %v2645 = vpop.f32.mrf.mxu0
    %v2646 = vadd.f32 %v2533, %v2645
    %2647 = vmatprep.mubr.bf16.mxu0 %v205
    %2648 = vmatmul.mubr.bf16.gmra.mxu0 %v204
    %v2649 = vpop.f32.mrf.mxu0
    %v2650 = vadd.f32 %v2537, %v2649
    %v2651 = vpop.f32.mrf.mxu0
    %v2652 = vadd.f32 %v2539, %v2651
    %v2653 = vpop.f32.mrf.mxu0
    %v2654 = vadd.f32 %v2541, %v2653
    %v2655 = vpop.f32.mrf.mxu0
    %v2656 = vadd.f32 %v2543, %v2655
    %2657 = vmatprep.mubr.bf16.mxu0 %v213
    %2658 = vmatmul.mubr.bf16.gmra.mxu0 %v212
    %v2659 = vpop.f32.mrf.mxu0
    %v2660 = vadd.f32 %v2547, %v2659
    %v2661 = vpop.f32.mrf.mxu0
    %v2662 = vadd.f32 %v2549, %v2661
    %v2663 = vpop.f32.mrf.mxu0
    %v2664 = vadd.f32 %v2551, %v2663
    %v2665 = vpop.f32.mrf.mxu0
    %v2666 = vadd.f32 %v2553, %v2665
    %2667 = vmatprep.mubr.bf16.mxu0 %v221
    %2668 = vmatmul.mubr.bf16.gmra.mxu0 %v220
    %v2669 = vpop.f32.mrf.mxu0
    %v2670 = vadd.f32 %v2557, %v2669
    %v2671 = vpop.f32.mrf.mxu0
    %v2672 = vadd.f32 %v2559, %v2671
    %v2673 = vpop.f32.mrf.mxu0
    %v2674 = vadd.f32 %v2561, %v2673
    %v2675 = vpop.f32.mrf.mxu0
    %v2676 = vadd.f32 %v2563, %v2675
    %2677 = vmatprep.mubr.bf16.mxu0 %v229
    %2678 = vmatmul.mubr.bf16.gmra.mxu0 %v228
    %v2679 = vpop.f32.mrf.mxu0
    %v2680 = vadd.f32 %v2567, %v2679
    %v2681 = vpop.f32.mrf.mxu0
    %v2682 = vadd.f32 %v2569, %v2681
    %v2683 = vpop.f32.mrf.mxu0
    %v2684 = vadd.f32 %v2571, %v2683
    %v2685 = vpop.f32.mrf.mxu0
    %v2686 = vadd.f32 %v2573, %v2685
    %2687 = vmatprep.mubr.bf16.mxu0 %v237
    %2688 = vmatmul.mubr.bf16.gmra.mxu0 %v236
    %v2689 = vpop.f32.mrf.mxu0
    %v2690 = vadd.f32 %v2577, %v2689
    %v2691 = vpop.f32.mrf.mxu0
    %v2692 = vadd.f32 %v2579, %v2691
    %v2693 = vpop.f32.mrf.mxu0
    %v2694 = vadd.f32 %v2581, %v2693
    %v2695 = vpop.f32.mrf.mxu0
    %v2696 = vadd.f32 %v2583, %v2695
    %2697 = vmatprep.mubr.bf16.mxu0 %v245
    %2698 = vmatmul.mubr.bf16.gmra.mxu0 %v244
    %v2699 = vpop.f32.mrf.mxu0
    %v2700 = vadd.f32 %v2587, %v2699
    %v2701 = vpop.f32.mrf.mxu0
    %v2702 = vadd.f32 %v2589, %v2701
    %v2703 = vpop.f32.mrf.mxu0
    %v2704 = vadd.f32 %v2591, %v2703
    %v2705 = vpop.f32.mrf.mxu0
    %v2706 = vadd.f32 %v2593, %v2705
    %2707 = vdwg.mxu0
    %v2708 = vmul.f32 %v2178, 0.5
    %v2709 = vmul.f32 %v2180, 0.5
    %v2710 = vmul.f32 %v2630, 0.5
    %v2711 = vmul.f32 %v2632, 0.5
    %v2712 = vmul.f32 %v2182, 0.5
    %v2713 = vmul.f32 %v2184, 0.5
    %v2714 = vmul.f32 %v2634, 0.5
    %v2715 = vmul.f32 %v2636, 0.5
    %v2716 = vmul.f32 %v2188, 0.5
    %v2717 = vmul.f32 %v2190, 0.5
    %v2718 = vmul.f32 %v2640, 0.5
    %v2719 = vmul.f32 %v2642, 0.5
    %v2720 = vmul.f32 %v2192, 0.5
    %v2721 = vmul.f32 %v2194, 0.5
    %v2722 = vmul.f32 %v2644, 0.5
    %v2723 = vmul.f32 %v2646, 0.5
    %v2724 = vmul.f32 %v2198, 0.5
    %v2725 = vmul.f32 %v2200, 0.5
    %v2726 = vmul.f32 %v2650, 0.5
    %v2727 = vmul.f32 %v2652, 0.5
    %v2728 = vmul.f32 %v2202, 0.5
    %v2729 = vmul.f32 %v2204, 0.5
    %v2730 = vmul.f32 %v2654, 0.5
    %v2731 = vmul.f32 %v2656, 0.5
    %v2732 = vmul.f32 %v2208, 0.5
    %v2733 = vmul.f32 %v2210, 0.5
    %v2734 = vmul.f32 %v2660, 0.5
    %v2735 = vmul.f32 %v2662, 0.5
    %v2736 = vmul.f32 %v2212, 0.5
    %v2737 = vmul.f32 %v2214, 0.5
    %v2738 = vmul.f32 %v2664, 0.5
    %v2739 = vmul.f32 %v2666, 0.5
    %v2740 = vmul.f32 %v2218, 0.5
    %v2741 = vmul.f32 %v2220, 0.5
    %v2742 = vmul.f32 %v2670, 0.5
    %v2743 = vmul.f32 %v2672, 0.5
    %v2744 = vmul.f32 %v2222, 0.5
    %v2745 = vmul.f32 %v2224, 0.5
    %v2746 = vmul.f32 %v2674, 0.5
    %v2747 = vmul.f32 %v2676, 0.5
    %v2748 = vmul.f32 %v2228, 0.5
    %v2749 = vmul.f32 %v2230, 0.5
    %v2750 = vmul.f32 %v2680, 0.5
    %v2751 = vmul.f32 %v2682, 0.5
    %v2752 = vmul.f32 %v2232, 0.5
    %v2753 = vmul.f32 %v2234, 0.5
    %v2754 = vmul.f32 %v2684, 0.5
    %v2755 = vmul.f32 %v2686, 0.5
    %v2756 = vmul.f32 %v2238, 0.5
    %v2757 = vmul.f32 %v2240, 0.5
    %v2758 = vmul.f32 %v2690, 0.5
    %v2759 = vmul.f32 %v2692, 0.5
    %v2760 = vmul.f32 %v2242, 0.5
    %v2761 = vmul.f32 %v2244, 0.5
    %v2762 = vmul.f32 %v2694, 0.5
    %v2763 = vmul.f32 %v2696, 0.5
    %v2764 = vmul.f32 %v2248, 0.5
    %v2765 = vmul.f32 %v2250, 0.5
    %v2766 = vmul.f32 %v2700, 0.5
    %v2767 = vmul.f32 %v2702, 0.5
    %v2768 = vmul.f32 %v2252, 0.5
    %v2769 = vmul.f32 %v2254, 0.5
    %v2770 = vmul.f32 %v2704, 0.5
    %v2771 = vmul.f32 %v2706, 0.5
    %v2772 = vtanh.pop %v2708
    %v2773 = vtanh.pop %v2709
    %v2774 = vtanh.pop %v2710
    %v2775 = vtanh.pop %v2711
    %v2776 = vtanh.pop %v2712
    %v2777 = vtanh.pop %v2713
    %v2778 = vtanh.pop %v2714
    %v2779 = vtanh.pop %v2715
    %v2780 = vtanh.pop %v2716
    %v2781 = vtanh.pop %v2717
    %v2782 = vtanh.pop %v2718
    %v2783 = vtanh.pop %v2719
    %v2784 = vtanh.pop %v2720
    %v2785 = vtanh.pop %v2721
    %v2786 = vtanh.pop %v2722
    %v2787 = vtanh.pop %v2723
    %v2788 = vtanh.pop %v2724
    %v2789 = vtanh.pop %v2725
    %v2790 = vtanh.pop %v2726
    %v2791 = vtanh.pop %v2727
    %v2792 = vtanh.pop %v2728
    %v2793 = vtanh.pop %v2729
    %v2794 = vtanh.pop %v2730
    %v2795 = vtanh.pop %v2731
    %v2796 = vtanh.pop %v2732
    %v2797 = vtanh.pop %v2733
    %v2798 = vtanh.pop %v2734
    %v2799 = vtanh.pop %v2735
    %v2800 = vtanh.pop %v2736
    %v2801 = vtanh.pop %v2737
    %v2802 = vtanh.pop %v2738
    %v2803 = vtanh.pop %v2739
    %v2804 = vtanh.pop %v2740
    %v2805 = vtanh.pop %v2741
    %v2806 = vtanh.pop %v2742
    %v2807 = vtanh.pop %v2743
    %v2808 = vtanh.pop %v2744
    %v2809 = vtanh.pop %v2745
    %v2810 = vtanh.pop %v2746
    %v2811 = vtanh.pop %v2747
    %v2812 = vtanh.pop %v2748
    %v2813 = vtanh.pop %v2749
    %v2814 = vtanh.pop %v2750
    %v2815 = vtanh.pop %v2751
    %v2816 = vtanh.pop %v2752
    %v2817 = vtanh.pop %v2753
    %v2818 = vtanh.pop %v2754
    %v2819 = vtanh.pop %v2755
    %v2820 = vtanh.pop %v2756
    %v2821 = vtanh.pop %v2757
    %v2822 = vtanh.pop %v2758
    %v2823 = vtanh.pop %v2759
    %v2824 = vtanh.pop %v2760
    %v2825 = vtanh.pop %v2761
    %v2826 = vtanh.pop %v2762
    %v2827 = vtanh.pop %v2763
    %v2828 = vtanh.pop %v2764
    %v2829 = vtanh.pop %v2765
    %v2830 = vtanh.pop %v2766
    %v2831 = vtanh.pop %v2767
    %v2832 = vtanh.pop %v2768
    %v2833 = vtanh.pop %v2769
    %v2834 = vtanh.pop %v2770
    %v2835 = vtanh.pop %v2771
    %v2836 = vadd.f32 %v2772, 1.0
    %v2837 = vadd.f32 %v2773, 1.0
    %v2838 = vadd.f32 %v2774, 1.0
    %v2839 = vadd.f32 %v2775, 1.0
    %v2840 = vadd.f32 %v2776, 1.0
    %v2841 = vadd.f32 %v2777, 1.0
    %v2842 = vadd.f32 %v2778, 1.0
    %v2843 = vadd.f32 %v2779, 1.0
    %v2844 = vadd.f32 %v2780, 1.0
    %v2845 = vadd.f32 %v2781, 1.0
    %v2846 = vadd.f32 %v2782, 1.0
    %v2847 = vadd.f32 %v2783, 1.0
    %v2848 = vadd.f32 %v2784, 1.0
    %v2849 = vadd.f32 %v2785, 1.0
    %v2850 = vadd.f32 %v2786, 1.0
    %v2851 = vadd.f32 %v2787, 1.0
    %v2852 = vadd.f32 %v2788, 1.0
    %v2853 = vadd.f32 %v2789, 1.0
    %v2854 = vadd.f32 %v2790, 1.0
    %v2855 = vadd.f32 %v2791, 1.0
    %v2856 = vadd.f32 %v2792, 1.0
    %v2857 = vadd.f32 %v2793, 1.0
    %v2858 = vadd.f32 %v2794, 1.0
    %v2859 = vadd.f32 %v2795, 1.0
    %v2860 = vadd.f32 %v2796, 1.0
    %v2861 = vadd.f32 %v2797, 1.0
    %v2862 = vadd.f32 %v2798, 1.0
    %v2863 = vadd.f32 %v2799, 1.0
    %v2864 = vadd.f32 %v2800, 1.0
    %v2865 = vadd.f32 %v2801, 1.0
    %v2866 = vadd.f32 %v2802, 1.0
    %v2867 = vadd.f32 %v2803, 1.0
    %v2868 = vadd.f32 %v2804, 1.0
    %v2869 = vadd.f32 %v2805, 1.0
    %v2870 = vadd.f32 %v2806, 1.0
    %v2871 = vadd.f32 %v2807, 1.0
    %v2872 = vadd.f32 %v2808, 1.0
    %v2873 = vadd.f32 %v2809, 1.0
    %v2874 = vadd.f32 %v2810, 1.0
    %v2875 = vadd.f32 %v2811, 1.0
    %v2876 = vadd.f32 %v2812, 1.0
    %v2877 = vadd.f32 %v2813, 1.0
    %v2878 = vadd.f32 %v2814, 1.0
    %v2879 = vadd.f32 %v2815, 1.0
    %v2880 = vadd.f32 %v2816, 1.0
    %v2881 = vadd.f32 %v2817, 1.0
    %v2882 = vadd.f32 %v2818, 1.0
    %v2883 = vadd.f32 %v2819, 1.0
    %v2884 = vadd.f32 %v2820, 1.0
    %v2885 = vadd.f32 %v2821, 1.0
    %v2886 = vadd.f32 %v2822, 1.0
    %v2887 = vadd.f32 %v2823, 1.0
    %v2888 = vadd.f32 %v2824, 1.0
    %v2889 = vadd.f32 %v2825, 1.0
    %v2890 = vadd.f32 %v2826, 1.0
    %v2891 = vadd.f32 %v2827, 1.0
    %v2892 = vadd.f32 %v2828, 1.0
    %v2893 = vadd.f32 %v2829, 1.0
    %v2894 = vadd.f32 %v2830, 1.0
    %v2895 = vadd.f32 %v2831, 1.0
    %v2896 = vadd.f32 %v2832, 1.0
    %v2897 = vadd.f32 %v2833, 1.0
    %v2898 = vadd.f32 %v2834, 1.0
    %v2899 = vadd.f32 %v2835, 1.0
    %v2900 = vmul.f32 %v2836, 0.5
    %v2901 = vmul.f32 %v2837, 0.5
    %v2902 = vmul.f32 %v2838, 0.5
    %v2903 = vmul.f32 %v2839, 0.5
    %v2904 = vmul.f32 %v2840, 0.5
    %v2905 = vmul.f32 %v2841, 0.5
    %v2906 = vmul.f32 %v2842, 0.5
    %v2907 = vmul.f32 %v2843, 0.5
    %v2908 = vmul.f32 %v2844, 0.5
    %v2909 = vmul.f32 %v2845, 0.5
    %v2910 = vmul.f32 %v2846, 0.5
    %v2911 = vmul.f32 %v2847, 0.5
    %v2912 = vmul.f32 %v2848, 0.5
    %v2913 = vmul.f32 %v2849, 0.5
    %v2914 = vmul.f32 %v2850, 0.5
    %v2915 = vmul.f32 %v2851, 0.5
    %v2916 = vmul.f32 %v2852, 0.5
    %v2917 = vmul.f32 %v2853, 0.5
    %v2918 = vmul.f32 %v2854, 0.5
    %v2919 = vmul.f32 %v2855, 0.5
    %v2920 = vmul.f32 %v2856, 0.5
    %v2921 = vmul.f32 %v2857, 0.5
    %v2922 = vmul.f32 %v2858, 0.5
    %v2923 = vmul.f32 %v2859, 0.5
    %v2924 = vmul.f32 %v2860, 0.5
    %v2925 = vmul.f32 %v2861, 0.5
    %v2926 = vmul.f32 %v2862, 0.5
    %v2927 = vmul.f32 %v2863, 0.5
    %v2928 = vmul.f32 %v2864, 0.5
    %v2929 = vmul.f32 %v2865, 0.5
    %v2930 = vmul.f32 %v2866, 0.5
    %v2931 = vmul.f32 %v2867, 0.5
    %v2932 = vmul.f32 %v2868, 0.5
    %v2933 = vmul.f32 %v2869, 0.5
    %v2934 = vmul.f32 %v2870, 0.5
    %v2935 = vmul.f32 %v2871, 0.5
    %v2936 = vmul.f32 %v2872, 0.5
    %v2937 = vmul.f32 %v2873, 0.5
    %v2938 = vmul.f32 %v2874, 0.5
    %v2939 = vmul.f32 %v2875, 0.5
    %v2940 = vmul.f32 %v2876, 0.5
    %v2941 = vmul.f32 %v2877, 0.5
    %v2942 = vmul.f32 %v2878, 0.5
    %v2943 = vmul.f32 %v2879, 0.5
    %v2944 = vmul.f32 %v2880, 0.5
    %v2945 = vmul.f32 %v2881, 0.5
    %v2946 = vmul.f32 %v2882, 0.5
    %v2947 = vmul.f32 %v2883, 0.5
    %v2948 = vmul.f32 %v2884, 0.5
    %v2949 = vmul.f32 %v2885, 0.5
    %v2950 = vmul.f32 %v2886, 0.5
    %v2951 = vmul.f32 %v2887, 0.5
    %v2952 = vmul.f32 %v2888, 0.5
    %v2953 = vmul.f32 %v2889, 0.5
    %v2954 = vmul.f32 %v2890, 0.5
    %v2955 = vmul.f32 %v2891, 0.5
    %v2956 = vmul.f32 %v2892, 0.5
    %v2957 = vmul.f32 %v2893, 0.5
    %v2958 = vmul.f32 %v2894, 0.5
    %v2959 = vmul.f32 %v2895, 0.5
    %v2960 = vmul.f32 %v2896, 0.5
    %v2961 = vmul.f32 %v2897, 0.5
    %v2962 = vmul.f32 %v2898, 0.5
    %v2963 = vmul.f32 %v2899, 0.5
    %v2964 = vmul.f32 %v2178, %v2900
    %v2965 = vmul.f32 %v2180, %v2901
    %v2966 = vmul.f32 %v2630, %v2902
    %v2967 = vmul.f32 %v2632, %v2903
    %v2968 = vmul.f32 %v2182, %v2904
    %v2969 = vmul.f32 %v2184, %v2905
    %v2970 = vmul.f32 %v2634, %v2906
    %v2971 = vmul.f32 %v2636, %v2907
    %v2972 = vmul.f32 %v2188, %v2908
    %v2973 = vmul.f32 %v2190, %v2909
    %v2974 = vmul.f32 %v2640, %v2910
    %v2975 = vmul.f32 %v2642, %v2911
    %v2976 = vmul.f32 %v2192, %v2912
    %v2977 = vmul.f32 %v2194, %v2913
    %v2978 = vmul.f32 %v2644, %v2914
    %v2979 = vmul.f32 %v2646, %v2915
    %v2980 = vmul.f32 %v2198, %v2916
    %v2981 = vmul.f32 %v2200, %v2917
    %v2982 = vmul.f32 %v2650, %v2918
    %v2983 = vmul.f32 %v2652, %v2919
    %v2984 = vmul.f32 %v2202, %v2920
    %v2985 = vmul.f32 %v2204, %v2921
    %v2986 = vmul.f32 %v2654, %v2922
    %v2987 = vmul.f32 %v2656, %v2923
    %v2988 = vmul.f32 %v2208, %v2924
    %v2989 = vmul.f32 %v2210, %v2925
    %v2990 = vmul.f32 %v2660, %v2926
    %v2991 = vmul.f32 %v2662, %v2927
    %v2992 = vmul.f32 %v2212, %v2928
    %v2993 = vmul.f32 %v2214, %v2929
    %v2994 = vmul.f32 %v2664, %v2930
    %v2995 = vmul.f32 %v2666, %v2931
    %v2996 = vmul.f32 %v2218, %v2932
    %v2997 = vmul.f32 %v2220, %v2933
    %v2998 = vmul.f32 %v2670, %v2934
    %v2999 = vmul.f32 %v2672, %v2935
    %v3000 = vmul.f32 %v2222, %v2936
    %v3001 = vmul.f32 %v2224, %v2937
    %v3002 = vmul.f32 %v2674, %v2938
    %v3003 = vmul.f32 %v2676, %v2939
    %v3004 = vmul.f32 %v2228, %v2940
    %v3005 = vmul.f32 %v2230, %v2941
    %v3006 = vmul.f32 %v2680, %v2942
    %v3007 = vmul.f32 %v2682, %v2943
    %v3008 = vmul.f32 %v2232, %v2944
    %v3009 = vmul.f32 %v2234, %v2945
    %v3010 = vmul.f32 %v2684, %v2946
    %v3011 = vmul.f32 %v2686, %v2947
    %v3012 = vmul.f32 %v2238, %v2948
    %v3013 = vmul.f32 %v2240, %v2949
    %v3014 = vmul.f32 %v2690, %v2950
    %v3015 = vmul.f32 %v2692, %v2951
    %v3016 = vmul.f32 %v2242, %v2952
    %v3017 = vmul.f32 %v2244, %v2953
    %v3018 = vmul.f32 %v2694, %v2954
    %v3019 = vmul.f32 %v2696, %v2955
    %v3020 = vmul.f32 %v2248, %v2956
    %v3021 = vmul.f32 %v2250, %v2957
    %v3022 = vmul.f32 %v2700, %v2958
    %v3023 = vmul.f32 %v2702, %v2959
    %v3024 = vmul.f32 %v2252, %v2960
    %v3025 = vmul.f32 %v2254, %v2961
    %v3026 = vmul.f32 %v2704, %v2962
    %v3027 = vmul.f32 %v2706, %v2963
    %v3028 = vtanh.pop %v2964
    %v3029 = vtanh.pop %v2965
    %v3030 = vtanh.pop %v2966
    %v3031 = vtanh.pop %v2967
    %v3032 = vtanh.pop %v2968
    %v3033 = vtanh.pop %v2969
    %v3034 = vtanh.pop %v2970
    %v3035 = vtanh.pop %v2971
    %v3036 = vtanh.pop %v2972
    %v3037 = vtanh.pop %v2973
    %v3038 = vtanh.pop %v2974
    %v3039 = vtanh.pop %v2975
    %v3040 = vtanh.pop %v2976
    %v3041 = vtanh.pop %v2977
    %v3042 = vtanh.pop %v2978
    %v3043 = vtanh.pop %v2979
    %v3044 = vtanh.pop %v2980
    %v3045 = vtanh.pop %v2981
    %v3046 = vtanh.pop %v2982
    %v3047 = vtanh.pop %v2983
    %v3048 = vtanh.pop %v2984
    %v3049 = vtanh.pop %v2985
    %v3050 = vtanh.pop %v2986
    %v3051 = vtanh.pop %v2987
    %v3052 = vtanh.pop %v2988
    %v3053 = vtanh.pop %v2989
    %v3054 = vtanh.pop %v2990
    %v3055 = vtanh.pop %v2991
    %v3056 = vtanh.pop %v2992
    %v3057 = vtanh.pop %v2993
    %v3058 = vtanh.pop %v2994
    %v3059 = vtanh.pop %v2995
    %v3060 = vtanh.pop %v2996
    %v3061 = vtanh.pop %v2997
    %v3062 = vtanh.pop %v2998
    %v3063 = vtanh.pop %v2999
    %v3064 = vtanh.pop %v3000
    %v3065 = vtanh.pop %v3001
    %v3066 = vtanh.pop %v3002
    %v3067 = vtanh.pop %v3003
    %v3068 = vtanh.pop %v3004
    %v3069 = vtanh.pop %v3005
    %v3070 = vtanh.pop %v3006
    %v3071 = vtanh.pop %v3007
    %v3072 = vtanh.pop %v3008
    %v3073 = vtanh.pop %v3009
    %v3074 = vtanh.pop %v3010
    %v3075 = vtanh.pop %v3011
    %v3076 = vtanh.pop %v3012
    %v3077 = vtanh.pop %v3013
    %v3078 = vtanh.pop %v3014
    %v3079 = vtanh.pop %v3015
    %v3080 = vtanh.pop %v3016
    %v3081 = vtanh.pop %v3017
    %v3082 = vtanh.pop %v3018
    %v3083 = vtanh.pop %v3019
    %v3084 = vtanh.pop %v3020
    %v3085 = vtanh.pop %v3021
    %v3086 = vtanh.pop %v3022
    %v3087 = vtanh.pop %v3023
    %v3088 = vtanh.pop %v3024
    %v3089 = vtanh.pop %v3025
    %v3090 = vtanh.pop %v3026
    %v3091 = vtanh.pop %v3027
    %v3092 = vmul.f32 %v3028, 0.5
    %v3093 = vmul.f32 %v3029, 0.5
    %v3094 = vmul.f32 %v3030, 0.5
    %v3095 = vmul.f32 %v3031, 0.5
    %v3096 = vmul.f32 %v3032, 0.5
    %v3097 = vmul.f32 %v3033, 0.5
    %v3098 = vmul.f32 %v3034, 0.5
    %v3099 = vmul.f32 %v3035, 0.5
    %v3100 = vmul.f32 %v3036, 0.5
    %v3101 = vmul.f32 %v3037, 0.5
    %v3102 = vmul.f32 %v3038, 0.5
    %v3103 = vmul.f32 %v3039, 0.5
    %v3104 = vmul.f32 %v3040, 0.5
    %v3105 = vmul.f32 %v3041, 0.5
    %v3106 = vmul.f32 %v3042, 0.5
    %v3107 = vmul.f32 %v3043, 0.5
    %v3108 = vmul.f32 %v3044, 0.5
    %v3109 = vmul.f32 %v3045, 0.5
    %v3110 = vmul.f32 %v3046, 0.5
    %v3111 = vmul.f32 %v3047, 0.5
    %v3112 = vmul.f32 %v3048, 0.5
    %v3113 = vmul.f32 %v3049, 0.5
    %v3114 = vmul.f32 %v3050, 0.5
    %v3115 = vmul.f32 %v3051, 0.5
    %v3116 = vmul.f32 %v3052, 0.5
    %v3117 = vmul.f32 %v3053, 0.5
    %v3118 = vmul.f32 %v3054, 0.5
    %v3119 = vmul.f32 %v3055, 0.5
    %v3120 = vmul.f32 %v3056, 0.5
    %v3121 = vmul.f32 %v3057, 0.5
    %v3122 = vmul.f32 %v3058, 0.5
    %v3123 = vmul.f32 %v3059, 0.5
    %v3124 = vmul.f32 %v3060, 0.5
    %v3125 = vmul.f32 %v3061, 0.5
    %v3126 = vmul.f32 %v3062, 0.5
    %v3127 = vmul.f32 %v3063, 0.5
    %v3128 = vmul.f32 %v3064, 0.5
    %v3129 = vmul.f32 %v3065, 0.5
    %v3130 = vmul.f32 %v3066, 0.5
    %v3131 = vmul.f32 %v3067, 0.5
    %v3132 = vmul.f32 %v3068, 0.5
    %v3133 = vmul.f32 %v3069, 0.5
    %v3134 = vmul.f32 %v3070, 0.5
    %v3135 = vmul.f32 %v3071, 0.5
    %v3136 = vmul.f32 %v3072, 0.5
    %v3137 = vmul.f32 %v3073, 0.5
    %v3138 = vmul.f32 %v3074, 0.5
    %v3139 = vmul.f32 %v3075, 0.5
    %v3140 = vmul.f32 %v3076, 0.5
    %v3141 = vmul.f32 %v3077, 0.5
    %v3142 = vmul.f32 %v3078, 0.5
    %v3143 = vmul.f32 %v3079, 0.5
    %v3144 = vmul.f32 %v3080, 0.5
    %v3145 = vmul.f32 %v3081, 0.5
    %v3146 = vmul.f32 %v3082, 0.5
    %v3147 = vmul.f32 %v3083, 0.5
    %v3148 = vmul.f32 %v3084, 0.5
    %v3149 = vmul.f32 %v3085, 0.5
    %v3150 = vmul.f32 %v3086, 0.5
    %v3151 = vmul.f32 %v3087, 0.5
    %v3152 = vmul.f32 %v3088, 0.5
    %v3153 = vmul.f32 %v3089, 0.5
    %v3154 = vmul.f32 %v3090, 0.5
    %v3155 = vmul.f32 %v3091, 0.5
    %v3156 = vmul.f32 %v3028, 0.70710677
    %v3157 = vmul.f32 %v3029, 0.70710677
    %v3158 = vmul.f32 %v3030, 0.70710677
    %v3159 = vmul.f32 %v3031, 0.70710677
    %v3160 = vmul.f32 %v3032, 0.70710677
    %v3161 = vmul.f32 %v3033, 0.70710677
    %v3162 = vmul.f32 %v3034, 0.70710677
    %v3163 = vmul.f32 %v3035, 0.70710677
    %v3164 = vmul.f32 %v3036, 0.70710677
    %v3165 = vmul.f32 %v3037, 0.70710677
    %v3166 = vmul.f32 %v3038, 0.70710677
    %v3167 = vmul.f32 %v3039, 0.70710677
    %v3168 = vmul.f32 %v3040, 0.70710677
    %v3169 = vmul.f32 %v3041, 0.70710677
    %v3170 = vmul.f32 %v3042, 0.70710677
    %v3171 = vmul.f32 %v3043, 0.70710677
    %v3172 = vmul.f32 %v3044, 0.70710677
    %v3173 = vmul.f32 %v3045, 0.70710677
    %v3174 = vmul.f32 %v3046, 0.70710677
    %v3175 = vmul.f32 %v3047, 0.70710677
    %v3176 = vmul.f32 %v3048, 0.70710677
    %v3177 = vmul.f32 %v3049, 0.70710677
    %v3178 = vmul.f32 %v3050, 0.70710677
    %v3179 = vmul.f32 %v3051, 0.70710677
    %v3180 = vmul.f32 %v3052, 0.70710677
    %v3181 = vmul.f32 %v3053, 0.70710677
    %v3182 = vmul.f32 %v3054, 0.70710677
    %v3183 = vmul.f32 %v3055, 0.70710677
    %v3184 = vmul.f32 %v3056, 0.70710677
    %v3185 = vmul.f32 %v3057, 0.70710677
    %v3186 = vmul.f32 %v3058, 0.70710677
    %v3187 = vmul.f32 %v3059, 0.70710677
    %v3188 = vmul.f32 %v3060, 0.70710677
    %v3189 = vmul.f32 %v3061, 0.70710677
    %v3190 = vmul.f32 %v3062, 0.70710677
    %v3191 = vmul.f32 %v3063, 0.70710677
    %v3192 = vmul.f32 %v3064, 0.70710677
    %v3193 = vmul.f32 %v3065, 0.70710677
    %v3194 = vmul.f32 %v3066, 0.70710677
    %v3195 = vmul.f32 %v3067, 0.70710677
    %v3196 = vmul.f32 %v3068, 0.70710677
    %v3197 = vmul.f32 %v3069, 0.70710677
    %v3198 = vmul.f32 %v3070, 0.70710677
    %v3199 = vmul.f32 %v3071, 0.70710677
    %v3200 = vmul.f32 %v3072, 0.70710677
    %v3201 = vmul.f32 %v3073, 0.70710677
    %v3202 = vmul.f32 %v3074, 0.70710677
    %v3203 = vmul.f32 %v3075, 0.70710677
    %v3204 = vmul.f32 %v3076, 0.70710677
    %v3205 = vmul.f32 %v3077, 0.70710677
    %v3206 = vmul.f32 %v3078, 0.70710677
    %v3207 = vmul.f32 %v3079, 0.70710677
    %v3208 = vmul.f32 %v3080, 0.70710677
    %v3209 = vmul.f32 %v3081, 0.70710677
    %v3210 = vmul.f32 %v3082, 0.70710677
    %v3211 = vmul.f32 %v3083, 0.70710677
    %v3212 = vmul.f32 %v3084, 0.70710677
    %v3213 = vmul.f32 %v3085, 0.70710677
    %v3214 = vmul.f32 %v3086, 0.70710677
    %v3215 = vmul.f32 %v3087, 0.70710677
    %v3216 = vmul.f32 %v3088, 0.70710677
    %v3217 = vmul.f32 %v3089, 0.70710677
    %v3218 = vmul.f32 %v3090, 0.70710677
    %v3219 = vmul.f32 %v3091, 0.70710677
    %v3220 = verf.f32.pop %v3156
    %v3221 = verf.f32.pop %v3157
    %v3222 = verf.f32.pop %v3158
    %v3223 = verf.f32.pop %v3159
    %v3224 = verf.f32.pop %v3160
    %v3225 = verf.f32.pop %v3161
    %v3226 = verf.f32.pop %v3162
    %v3227 = verf.f32.pop %v3163
    %v3228 = verf.f32.pop %v3164
    %v3229 = verf.f32.pop %v3165
    %v3230 = verf.f32.pop %v3166
    %v3231 = verf.f32.pop %v3167
    %v3232 = verf.f32.pop %v3168
    %v3233 = verf.f32.pop %v3169
    %v3234 = verf.f32.pop %v3170
    %v3235 = verf.f32.pop %v3171
    %v3236 = verf.f32.pop %v3172
    %v3237 = verf.f32.pop %v3173
    %v3238 = verf.f32.pop %v3174
    %v3239 = verf.f32.pop %v3175
    %v3240 = verf.f32.pop %v3176
    %v3241 = verf.f32.pop %v3177
    %v3242 = verf.f32.pop %v3178
    %v3243 = verf.f32.pop %v3179
    %v3244 = verf.f32.pop %v3180
    %v3245 = verf.f32.pop %v3181
    %v3246 = verf.f32.pop %v3182
    %v3247 = verf.f32.pop %v3183
    %v3248 = verf.f32.pop %v3184
    %v3249 = verf.f32.pop %v3185
    %v3250 = verf.f32.pop %v3186
    %v3251 = verf.f32.pop %v3187
    %v3252 = verf.f32.pop %v3188
    %v3253 = verf.f32.pop %v3189
    %v3254 = verf.f32.pop %v3190
    %v3255 = verf.f32.pop %v3191
    %v3256 = verf.f32.pop %v3192
    %v3257 = verf.f32.pop %v3193
    %v3258 = verf.f32.pop %v3194
    %v3259 = verf.f32.pop %v3195
    %v3260 = verf.f32.pop %v3196
    %v3261 = verf.f32.pop %v3197
    %v3262 = verf.f32.pop %v3198
    %v3263 = verf.f32.pop %v3199
    %v3264 = verf.f32.pop %v3200
    %v3265 = verf.f32.pop %v3201
    %v3266 = verf.f32.pop %v3202
    %v3267 = verf.f32.pop %v3203
    %v3268 = verf.f32.pop %v3204
    %v3269 = verf.f32.pop %v3205
    %v3270 = verf.f32.pop %v3206
    %v3271 = verf.f32.pop %v3207
    %v3272 = verf.f32.pop %v3208
    %v3273 = verf.f32.pop %v3209
    %v3274 = verf.f32.pop %v3210
    %v3275 = verf.f32.pop %v3211
    %v3276 = verf.f32.pop %v3212
    %v3277 = verf.f32.pop %v3213
    %v3278 = verf.f32.pop %v3214
    %v3279 = verf.f32.pop %v3215
    %v3280 = verf.f32.pop %v3216
    %v3281 = verf.f32.pop %v3217
    %v3282 = verf.f32.pop %v3218
    %v3283 = verf.f32.pop %v3219
    %v3284 = vadd.f32 %v3220, 1.0
    %v3285 = vadd.f32 %v3221, 1.0
    %v3286 = vadd.f32 %v3222, 1.0
    %v3287 = vadd.f32 %v3223, 1.0
    %v3288 = vadd.f32 %v3224, 1.0
    %v3289 = vadd.f32 %v3225, 1.0
    %v3290 = vadd.f32 %v3226, 1.0
    %v3291 = vadd.f32 %v3227, 1.0
    %v3292 = vadd.f32 %v3228, 1.0
    %v3293 = vadd.f32 %v3229, 1.0
    %v3294 = vadd.f32 %v3230, 1.0
    %v3295 = vadd.f32 %v3231, 1.0
    %v3296 = vadd.f32 %v3232, 1.0
    %v3297 = vadd.f32 %v3233, 1.0
    %v3298 = vadd.f32 %v3234, 1.0
    %v3299 = vadd.f32 %v3235, 1.0
    %v3300 = vadd.f32 %v3236, 1.0
    %v3301 = vadd.f32 %v3237, 1.0
    %v3302 = vadd.f32 %v3238, 1.0
    %v3303 = vadd.f32 %v3239, 1.0
    %v3304 = vadd.f32 %v3240, 1.0
    %v3305 = vadd.f32 %v3241, 1.0
    %v3306 = vadd.f32 %v3242, 1.0
    %v3307 = vadd.f32 %v3243, 1.0
    %v3308 = vadd.f32 %v3244, 1.0
    %v3309 = vadd.f32 %v3245, 1.0
    %v3310 = vadd.f32 %v3246, 1.0
    %v3311 = vadd.f32 %v3247, 1.0
    %v3312 = vadd.f32 %v3248, 1.0
    %v3313 = vadd.f32 %v3249, 1.0
    %v3314 = vadd.f32 %v3250, 1.0
    %v3315 = vadd.f32 %v3251, 1.0
    %v3316 = vadd.f32 %v3252, 1.0
    %v3317 = vadd.f32 %v3253, 1.0
    %v3318 = vadd.f32 %v3254, 1.0
    %v3319 = vadd.f32 %v3255, 1.0
    %v3320 = vadd.f32 %v3256, 1.0
    %v3321 = vadd.f32 %v3257, 1.0
    %v3322 = vadd.f32 %v3258, 1.0
    %v3323 = vadd.f32 %v3259, 1.0
    %v3324 = vadd.f32 %v3260, 1.0
    %v3325 = vadd.f32 %v3261, 1.0
    %v3326 = vadd.f32 %v3262, 1.0
    %v3327 = vadd.f32 %v3263, 1.0
    %v3328 = vadd.f32 %v3264, 1.0
    %v3329 = vadd.f32 %v3265, 1.0
    %v3330 = vadd.f32 %v3266, 1.0
    %v3331 = vadd.f32 %v3267, 1.0
    %v3332 = vadd.f32 %v3268, 1.0
    %v3333 = vadd.f32 %v3269, 1.0
    %v3334 = vadd.f32 %v3270, 1.0
    %v3335 = vadd.f32 %v3271, 1.0
    %v3336 = vadd.f32 %v3272, 1.0
    %v3337 = vadd.f32 %v3273, 1.0
    %v3338 = vadd.f32 %v3274, 1.0
    %v3339 = vadd.f32 %v3275, 1.0
    %v3340 = vadd.f32 %v3276, 1.0
    %v3341 = vadd.f32 %v3277, 1.0
    %v3342 = vadd.f32 %v3278, 1.0
    %v3343 = vadd.f32 %v3279, 1.0
    %v3344 = vadd.f32 %v3280, 1.0
    %v3345 = vadd.f32 %v3281, 1.0
    %v3346 = vadd.f32 %v3282, 1.0
    %v3347 = vadd.f32 %v3283, 1.0
    %v3348 = vmul.f32 %v3092, %v3284
    %v3349 = vmul.f32 %v3093, %v3285
    %v3350 = vmul.f32 %v3094, %v3286
    %v3351 = vmul.f32 %v3095, %v3287
    %v3352 = vmul.f32 %v3096, %v3288
    %v3353 = vmul.f32 %v3097, %v3289
    %v3354 = vmul.f32 %v3098, %v3290
    %v3355 = vmul.f32 %v3099, %v3291
    %v3356 = vmul.f32 %v3100, %v3292
    %v3357 = vmul.f32 %v3101, %v3293
    %v3358 = vmul.f32 %v3102, %v3294
    %v3359 = vmul.f32 %v3103, %v3295
    %v3360 = vmul.f32 %v3104, %v3296
    %v3361 = vmul.f32 %v3105, %v3297
    %v3362 = vmul.f32 %v3106, %v3298
    %v3363 = vmul.f32 %v3107, %v3299
    %v3364 = vmul.f32 %v3108, %v3300
    %v3365 = vmul.f32 %v3109, %v3301
    %v3366 = vmul.f32 %v3110, %v3302
    %v3367 = vmul.f32 %v3111, %v3303
    %v3368 = vmul.f32 %v3112, %v3304
    %v3369 = vmul.f32 %v3113, %v3305
    %v3370 = vmul.f32 %v3114, %v3306
    %v3371 = vmul.f32 %v3115, %v3307
    %v3372 = vmul.f32 %v3116, %v3308
    %v3373 = vmul.f32 %v3117, %v3309
    %v3374 = vmul.f32 %v3118, %v3310
    %v3375 = vmul.f32 %v3119, %v3311
    %v3376 = vmul.f32 %v3120, %v3312
    %v3377 = vmul.f32 %v3121, %v3313
    %v3378 = vmul.f32 %v3122, %v3314
    %v3379 = vmul.f32 %v3123, %v3315
    %v3380 = vmul.f32 %v3124, %v3316
    %v3381 = vmul.f32 %v3125, %v3317
    %v3382 = vmul.f32 %v3126, %v3318
    %v3383 = vmul.f32 %v3127, %v3319
    %v3384 = vmul.f32 %v3128, %v3320
    %v3385 = vmul.f32 %v3129, %v3321
    %v3386 = vmul.f32 %v3130, %v3322
    %v3387 = vmul.f32 %v3131, %v3323
    %v3388 = vmul.f32 %v3132, %v3324
    %v3389 = vmul.f32 %v3133, %v3325
    %v3390 = vmul.f32 %v3134, %v3326
    %v3391 = vmul.f32 %v3135, %v3327
    %v3392 = vmul.f32 %v3136, %v3328
    %v3393 = vmul.f32 %v3137, %v3329
    %v3394 = vmul.f32 %v3138, %v3330
    %v3395 = vmul.f32 %v3139, %v3331
    %v3396 = vmul.f32 %v3140, %v3332
    %v3397 = vmul.f32 %v3141, %v3333
    %v3398 = vmul.f32 %v3142, %v3334
    %v3399 = vmul.f32 %v3143, %v3335
    %v3400 = vmul.f32 %v3144, %v3336
    %v3401 = vmul.f32 %v3145, %v3337
    %v3402 = vmul.f32 %v3146, %v3338
    %v3403 = vmul.f32 %v3147, %v3339
    %v3404 = vmul.f32 %v3148, %v3340
    %v3405 = vmul.f32 %v3149, %v3341
    %v3406 = vmul.f32 %v3150, %v3342
    %v3407 = vmul.f32 %v3151, %v3343
    %v3408 = vmul.f32 %v3152, %v3344
    %v3409 = vmul.f32 %v3153, %v3345
    %v3410 = vmul.f32 %v3154, %v3346
    %v3411 = vmul.f32 %v3155, %v3347
    %3412 = vst [vmem:[#allocation8] sm:$0xff] %v3348
    %3413 = vst [vmem:[#allocation8 + $0x8] sm:$0xff] %v3349
    %3414 = vst [vmem:[#allocation8 + $0x10] sm:$0xff] %v3350
    %3415 = vst [vmem:[#allocation8 + $0x18] sm:$0xff] %v3351
    %3416 = vst [vmem:[#allocation8 + $0x20] sm:$0xff] %v3352
    %3417 = vst [vmem:[#allocation8 + $0x28] sm:$0xff] %v3353
    %3418 = vst [vmem:[#allocation8 + $0x30] sm:$0xff] %v3354
    %3419 = vst [vmem:[#allocation8 + $0x38] sm:$0xff] %v3355
    %3420 = vst [vmem:[#allocation8 + $0x40] sm:$0xff] %v3356
    %3421 = vst [vmem:[#allocation8 + $0x48] sm:$0xff] %v3357
    %3422 = vst [vmem:[#allocation8 + $0x50] sm:$0xff] %v3358
    %3423 = vst [vmem:[#allocation8 + $0x58] sm:$0xff] %v3359
    %3424 = vst [vmem:[#allocation8 + $0x60] sm:$0xff] %v3360
    %3425 = vst [vmem:[#allocation8 + $0x68] sm:$0xff] %v3361
    %3426 = vst [vmem:[#allocation8 + $0x70] sm:$0xff] %v3362
    %3427 = vst [vmem:[#allocation8 + $0x78] sm:$0xff] %v3363
    %3428 = vst [vmem:[#allocation8 + $0x80] sm:$0xff] %v3364
    %3429 = vst [vmem:[#allocation8 + $0x88] sm:$0xff] %v3365
    %3430 = vst [vmem:[#allocation8 + $0x90] sm:$0xff] %v3366
    %3431 = vst [vmem:[#allocation8 + $0x98] sm:$0xff] %v3367
    %3432 = vst [vmem:[#allocation8 + $0xa0] sm:$0xff] %v3368
    %3433 = vst [vmem:[#allocation8 + $0xa8] sm:$0xff] %v3369
    %3434 = vst [vmem:[#allocation8 + $0xb0] sm:$0xff] %v3370
    %3435 = vst [vmem:[#allocation8 + $0xb8] sm:$0xff] %v3371
    %3436 = vst [vmem:[#allocation8 + $0xc0] sm:$0xff] %v3372
    %3437 = vst [vmem:[#allocation8 + $0xc8] sm:$0xff] %v3373
    %3438 = vst [vmem:[#allocation8 + $0xd0] sm:$0xff] %v3374
    %3439 = vst [vmem:[#allocation8 + $0xd8] sm:$0xff] %v3375
    %3440 = vst [vmem:[#allocation8 + $0xe0] sm:$0xff] %v3376
    %3441 = vst [vmem:[#allocation8 + $0xe8] sm:$0xff] %v3377
    %3442 = vst [vmem:[#allocation8 + $0xf0] sm:$0xff] %v3378
    %3443 = vst [vmem:[#allocation8 + $0xf8] sm:$0xff] %v3379
    %3444 = vst [vmem:[#allocation8 + $0x100] sm:$0xff] %v3380
    %3445 = vst [vmem:[#allocation8 + $0x108] sm:$0xff] %v3381
    %3446 = vst [vmem:[#allocation8 + $0x110] sm:$0xff] %v3382
    %3447 = vst [vmem:[#allocation8 + $0x118] sm:$0xff] %v3383
    %3448 = vst [vmem:[#allocation8 + $0x120] sm:$0xff] %v3384
    %3449 = vst [vmem:[#allocation8 + $0x128] sm:$0xff] %v3385
    %3450 = vst [vmem:[#allocation8 + $0x130] sm:$0xff] %v3386
    %3451 = vst [vmem:[#allocation8 + $0x138] sm:$0xff] %v3387
    %3452 = vst [vmem:[#allocation8 + $0x140] sm:$0xff] %v3388
    %3453 = vst [vmem:[#allocation8 + $0x148] sm:$0xff] %v3389
    %3454 = vst [vmem:[#allocation8 + $0x150] sm:$0xff] %v3390
    %3455 = vst [vmem:[#allocation8 + $0x158] sm:$0xff] %v3391
    %3456 = vst [vmem:[#allocation8 + $0x160] sm:$0xff] %v3392
    %3457 = vst [vmem:[#allocation8 + $0x168] sm:$0xff] %v3393
    %3458 = vst [vmem:[#allocation8 + $0x170] sm:$0xff] %v3394
    %3459 = vst [vmem:[#allocation8 + $0x178] sm:$0xff] %v3395
    %3460 = vst [vmem:[#allocation8 + $0x180] sm:$0xff] %v3396
    %3461 = vst [vmem:[#allocation8 + $0x188] sm:$0xff] %v3397
    %3462 = vst [vmem:[#allocation8 + $0x190] sm:$0xff] %v3398
    %3463 = vst [vmem:[#allocation8 + $0x198] sm:$0xff] %v3399
    %3464 = vst [vmem:[#allocation8 + $0x1a0] sm:$0xff] %v3400
    %3465 = vst [vmem:[#allocation8 + $0x1a8] sm:$0xff] %v3401
    %3466 = vst [vmem:[#allocation8 + $0x1b0] sm:$0xff] %v3402
    %3467 = vst [vmem:[#allocation8 + $0x1b8] sm:$0xff] %v3403
    %3468 = vst [vmem:[#allocation8 + $0x1c0] sm:$0xff] %v3404
    %3469 = vst [vmem:[#allocation8 + $0x1c8] sm:$0xff] %v3405
    %3470 = vst [vmem:[#allocation8 + $0x1d0] sm:$0xff] %v3406
    %3471 = vst [vmem:[#allocation8 + $0x1d8] sm:$0xff] %v3407
    %3472 = vst [vmem:[#allocation8 + $0x1e0] sm:$0xff] %v3408
    %3473 = vst [vmem:[#allocation8 + $0x1e8] sm:$0xff] %v3409
    %3474 = vst [vmem:[#allocation8 + $0x1f0] sm:$0xff] %v3410
    %3475 = vst [vmem:[#allocation8 + $0x1f8] sm:$0xff] %v3411
    // Predicated region
    $region26: #{tpu_custom_call.1} parent=1 // pred_check
      _
    $region27: #{tpu_custom_call.1} parent=1 // pred_check_branch
      %3477 = sbr.rel (0) target = $region29
    $region28: #{tpu_custom_call.1} parent=1 // pred_region
      %s3479 = ssub.s32 8192, 8192
      %3480 = vsyncadd [#allocation4], %s3479
      %s3481 = sshll.u32 [#allocation8], 4
      %s3482 = int_to_ptr.vmem [resolvable:$true] %s3481
      %3487 = dma.vmem_to_hbm [thread:$0]  %s3482, 8192, %s3, [#allocation4], 512, 512, 32
    $region29: #{tpu_custom_call.1} parent=1 // pred_fallthru
      _
    // Predicated region
    $region30: #{tpu_custom_call.1} parent=1 // pred_check
      _
    $region31: #{tpu_custom_call.1} parent=1 // pred_check_branch
      %3489 = sbr.rel (0) target = $region33
    $region32: #{tpu_custom_call.1} parent=1 // pred_region
      %3490 = dma.done [#allocation4], 8192
    $region33: #{tpu_custom_call.1} parent=1 // pred_fallthru
      _
    %3491 = vsyncpa [#allocation3], 1
    %3492 = vsyncpa [#allocation6], 1
    %3493 = vsyncpa [#allocation4], 1

</llo_original>
